<compile_context>
chip_gen: v7x
topology: tpu7x:2x2x1
jax: 0.10.0
libtpu: 0.0.40
codegen_flags: <defaults>
</compile_context>

<pallas_src>
import functools
import math

import jax
import jax.numpy as jnp
from jax.experimental import pallas as pl
from jax.experimental.pallas import tpu as pltpu


# ---------------------------------------------------------------------------
# Fused MultiHeadedAttn kernel: one batch element per grid step.
# ---------------------------------------------------------------------------
def _mha_fused_kernel(q_ref, k_ref, v_ref,
                      wq_ref, wk_ref, wv_ref, wo_ref,
                      bq_ref, bk_ref, bv_ref, bo_ref,
                      o_ref, *, heads, scale):
    # q_ref/k_ref/v_ref: (1, T, D) input blocks
    # w*_ref: (D, D) weights, pre-transposed to (d_in, d_out); b*_ref: (1, D)
    # o_ref: (1, Tq, D) output block
    f32 = jnp.float32

    xq = q_ref[0].astype(f32)                      # (Tq, D)
    xk = k_ref[0].astype(f32)                      # (Tk, D)
    xv = v_ref[0].astype(f32)                      # (Tk, D)

    wq = wq_ref[...].astype(f32)
    wk = wk_ref[...].astype(f32)
    wv = wv_ref[...].astype(f32)
    wo = wo_ref[...].astype(f32)

    # Linear projections (y = x @ W^T + b, weights already transposed).
    q = jnp.dot(xq, wq, preferred_element_type=f32) + bq_ref[...].astype(f32)
    k = jnp.dot(xk, wk, preferred_element_type=f32) + bk_ref[...].astype(f32)
    v = jnp.dot(xv, wv, preferred_element_type=f32) + bv_ref[...].astype(f32)

    d_model = q.shape[-1]
    d_k = d_model // heads

    # Per-head attention via static lane slices (same columns as the PyTorch
    # view(B, T, H, d_k).transpose(1, 2) head split).
    ctx_parts = []
    for h in range(heads):                          # static unroll (small H)
        lo = h * d_k
        qh = q[:, lo:lo + d_k]                      # (Tq, d_k)
        kh = k[:, lo:lo + d_k]                      # (Tk, d_k)
        vh = v[:, lo:lo + d_k]                      # (Tk, d_k)
        # scores = qh @ kh^T * 1/sqrt(d_k)  (contract over d_k, no transpose op)
        s = jax.lax.dot_general(
            qh, kh, (((1,), (1,)), ((), ())), preferred_element_type=f32
        ) * scale
        # TODO(synk): optional mask path (masked_fill -1e9); this forward uses mask=None.
        s = s - jnp.max(s, axis=-1, keepdims=True)
        p = jnp.exp(s)
        p = p / jnp.sum(p, axis=-1, keepdims=True)
        # TODO(synk): attention-prob dropout is train-mode only; eval forward is identity.
        ctx_parts.append(jnp.dot(p, vh, preferred_element_type=f32))

    ctx = jnp.concatenate(ctx_parts, axis=-1)       # (Tq, D), merged heads
    out = jnp.dot(ctx, wo, preferred_element_type=f32) + bo_ref[...].astype(f32)
    o_ref[0] = out.astype(o_ref.dtype)


def multi_headed_attn(query, key, value, params, *, heads):
    """Full MultiHeadedAttn forward (mask=None, eval mode) in one pallas_call."""
    wq, bq, wk, bk, wv, bv, wo, bo = params
    B, Tq, D = query.shape
    Tk = key.shape[1]
    assert D % heads == 0
    scale = 1.0 / math.sqrt(D // heads)

    # Pre-transpose weights so the output feature dim sits on lanes; biases as rows.
    wqt, wkt, wvt, wot = (jnp.asarray(w).T for w in (wq, wk, wv, wo))
    bq2, bk2, bv2, bo2 = (jnp.asarray(b).reshape(1, D) for b in (bq, bk, bv, bo))

    kern = functools.partial(_mha_fused_kernel, heads=heads, scale=scale)

    # Constant block indices -> weights/biases stay VMEM-resident across steps.
    w_spec = pl.BlockSpec((D, D), lambda b: (0, 0))
    b_spec = pl.BlockSpec((1, D), lambda b: (0, 0))

    return pl.pallas_call(
        kern,
        out_shape=jax.ShapeDtypeStruct((B, Tq, D), query.dtype),
        grid_spec=pltpu.PrefetchScalarGridSpec(
            num_scalar_prefetch=0,
            grid=(B,),
            in_specs=[
                pl.BlockSpec((1, Tq, D), lambda b: (b, 0, 0)),
                pl.BlockSpec((1, Tk, D), lambda b: (b, 0, 0)),
                pl.BlockSpec((1, Tk, D), lambda b: (b, 0, 0)),
                w_spec, w_spec, w_spec, w_spec,
                b_spec, b_spec, b_spec, b_spec,
            ],
            out_specs=pl.BlockSpec((1, Tq, D), lambda b: (b, 0, 0)),
        ),
        compiler_params=pltpu.CompilerParams(
            dimension_semantics=("parallel",),
            vmem_limit_bytes=48 * 1024 * 1024,      # fits v7x's 64 MiB VMEM
        ),
    )(query, key, value, wqt, wkt, wvt, wot, bq2, bk2, bv2, bo2)


# ---------------------------------------------------------------------------
# Pure-JAX reference (same math as the PyTorch forward, eval mode).
# ---------------------------------------------------------------------------
def _ref_forward(query, key, value, params, heads):
    wq, bq, wk, bk, wv, bv, wo, bo = params
    B, Tq, D = query.shape
    Tk = key.shape[1]
    d_k = D // heads
    hp = jax.lax.Precision.HIGHEST
    q = jnp.einsum('btd,ed->bte', query, wq, precision=hp) + bq
    k = jnp.einsum('btd,ed->bte', key, wk, precision=hp) + bk
    v = jnp.einsum('btd,ed->bte', value, wv, precision=hp) + bv
    q = q.reshape(B, Tq, heads, d_k).transpose(0, 2, 1, 3)
    k = k.reshape(B, Tk, heads, d_k).transpose(0, 2, 1, 3)
    v = v.reshape(B, Tk, heads, d_k).transpose(0, 2, 1, 3)
    s = jnp.einsum('bhqd,bhkd->bhqk', q, k, precision=hp) / math.sqrt(d_k)
    p = jax.nn.softmax(s, axis=-1)
    x = jnp.einsum('bhqk,bhkd->bhqd', p, v, precision=hp)
    x = x.transpose(0, 2, 1, 3).reshape(B, Tq, heads * d_k)
    return jnp.einsum('btd,ed->bte', x, wo, precision=hp) + bo


if __name__ == "__main__":
    key = jax.random.PRNGKey(0)
    # Small shapes consistent with the module: d_model % heads == 0, and
    # d_model a multiple of 128 so the kernel is lane-dense.
    B, T, heads, d_model = 2, 16, 4, 128

    ks = jax.random.split(key, 11)
    wscale = 1.0 / math.sqrt(d_model)
    wq = jax.random.normal(ks[0], (d_model, d_model), jnp.float32) * wscale
    wk = jax.random.normal(ks[1], (d_model, d_model), jnp.float32) * wscale
    wv = jax.random.normal(ks[2], (d_model, d_model), jnp.float32) * wscale
    wo = jax.random.normal(ks[3], (d_model, d_model), jnp.float32) * wscale
    bq = jax.random.normal(ks[4], (d_model,), jnp.float32) * 0.1
    bk = jax.random.normal(ks[5], (d_model,), jnp.float32) * 0.1
    bv = jax.random.normal(ks[6], (d_model,), jnp.float32) * 0.1
    bo = jax.random.normal(ks[7], (d_model,), jnp.float32) * 0.1
    params = (wq, bq, wk, bk, wv, bv, wo, bo)

    query = jax.random.normal(ks[8], (B, T, d_model), jnp.float32)
    key_in = jax.random.normal(ks[9], (B, T, d_model), jnp.float32)
    value = jax.random.normal(ks[10], (B, T, d_model), jnp.float32)

    out = multi_headed_attn(query, key_in, value, params, heads=heads)
    out = jax.block_until_ready(out)

    ref = _ref_forward(query, key_in, value, params, heads)
    assert out.shape == ref.shape
    max_err = float(jnp.max(jnp.abs(out - ref)))
    assert jnp.allclose(out, ref, atol=1e-2, rtol=1e-2), f"mismatch vs reference: {max_err}"

    print("KERNEL_OK")
</pallas_src>

<mosaic_0001>
module attributes {stable_mosaic.version = 11 : i64} {
  func.func @_mha_fused_kernel(%arg0: i32, %arg1: memref<1x16x128xf32, #tpu.memory_space<vmem>>, %arg2: memref<1x16x128xf32, #tpu.memory_space<vmem>>, %arg3: memref<1x16x128xf32, #tpu.memory_space<vmem>>, %arg4: memref<128x128xf32, #tpu.memory_space<vmem>>, %arg5: memref<128x128xf32, #tpu.memory_space<vmem>>, %arg6: memref<128x128xf32, #tpu.memory_space<vmem>>, %arg7: memref<128x128xf32, #tpu.memory_space<vmem>>, %arg8: memref<1x128xf32, #tpu.memory_space<vmem>>, %arg9: memref<1x128xf32, #tpu.memory_space<vmem>>, %arg10: memref<1x128xf32, #tpu.memory_space<vmem>>, %arg11: memref<1x128xf32, #tpu.memory_space<vmem>>, %arg12: memref<1x16x128xf32, #tpu.memory_space<vmem>>) attributes {dimension_semantics = [#tpu.dimension_semantics<parallel>], iteration_bounds = array<i64: 2>, scalar_prefetch = 0 : i64, scratch_operands = 0 : i64, tpu.core_type = #tpu.core_type<tc>, window_params = [{transform_indices = @transform_0, window_bounds = array<i64: 1, 16, 128>}, {transform_indices = @transform_1, window_bounds = array<i64: 1, 16, 128>}, {transform_indices = @transform_2, window_bounds = array<i64: 1, 16, 128>}, {pipeline_mode = #tpu.pipeline_mode<synchronous>, transform_indices = @transform_3, window_bounds = array<i64: 128, 128>}, {pipeline_mode = #tpu.pipeline_mode<synchronous>, transform_indices = @transform_4, window_bounds = array<i64: 128, 128>}, {pipeline_mode = #tpu.pipeline_mode<synchronous>, transform_indices = @transform_5, window_bounds = array<i64: 128, 128>}, {pipeline_mode = #tpu.pipeline_mode<synchronous>, transform_indices = @transform_6, window_bounds = array<i64: 128, 128>}, {pipeline_mode = #tpu.pipeline_mode<synchronous>, transform_indices = @transform_7, window_bounds = array<i64: 1, 128>}, {pipeline_mode = #tpu.pipeline_mode<synchronous>, transform_indices = @transform_8, window_bounds = array<i64: 1, 128>}, {pipeline_mode = #tpu.pipeline_mode<synchronous>, transform_indices = @transform_9, window_bounds = array<i64: 1, 128>}, {pipeline_mode = #tpu.pipeline_mode<synchronous>, transform_indices = @transform_10, window_bounds = array<i64: 1, 128>}, {transform_indices = @transform_11, window_bounds = array<i64: 1, 16, 128>}]} {
    %c0 = arith.constant 0 : index
    %c0_0 = arith.constant 0 : index
    %c0_1 = arith.constant 0 : index
    %0 = vector.load %arg1[%c0, %c0_0, %c0_1] : memref<1x16x128xf32, #tpu.memory_space<vmem>>, vector<1x16x128xf32>
    %1 = vector.shape_cast %0 : vector<1x16x128xf32> to vector<16x128xf32>
    %c0_2 = arith.constant 0 : index
    %c0_3 = arith.constant 0 : index
    %c0_4 = arith.constant 0 : index
    %2 = vector.load %arg2[%c0_2, %c0_3, %c0_4] : memref<1x16x128xf32, #tpu.memory_space<vmem>>, vector<1x16x128xf32>
    %3 = vector.shape_cast %2 : vector<1x16x128xf32> to vector<16x128xf32>
    %c0_5 = arith.constant 0 : index
    %c0_6 = arith.constant 0 : index
    %c0_7 = arith.constant 0 : index
    %4 = vector.load %arg3[%c0_5, %c0_6, %c0_7] : memref<1x16x128xf32, #tpu.memory_space<vmem>>, vector<1x16x128xf32>
    %5 = vector.shape_cast %4 : vector<1x16x128xf32> to vector<16x128xf32>
    %c0_8 = arith.constant 0 : index
    %c0_9 = arith.constant 0 : index
    %6 = vector.load %arg4[%c0_8, %c0_9] : memref<128x128xf32, #tpu.memory_space<vmem>>, vector<128x128xf32>
    %c0_10 = arith.constant 0 : index
    %c0_11 = arith.constant 0 : index
    %7 = vector.load %arg5[%c0_10, %c0_11] : memref<128x128xf32, #tpu.memory_space<vmem>>, vector<128x128xf32>
    %c0_12 = arith.constant 0 : index
    %c0_13 = arith.constant 0 : index
    %8 = vector.load %arg6[%c0_12, %c0_13] : memref<128x128xf32, #tpu.memory_space<vmem>>, vector<128x128xf32>
    %c0_14 = arith.constant 0 : index
    %c0_15 = arith.constant 0 : index
    %9 = vector.load %arg7[%c0_14, %c0_15] : memref<128x128xf32, #tpu.memory_space<vmem>>, vector<128x128xf32>
    %cst = arith.constant dense<0.000000e+00> : vector<16x128xf32>
    %10 = tpu.matmul %1, %6, %cst {dimension_numbers = #tpu.dot_dimension_numbers<[1], [0], [0], [1], [0, 0, 1, 1], [], []>} : vector<16x128xf32>, vector<128x128xf32>, vector<16x128xf32> -> vector<16x128xf32>
    %c0_16 = arith.constant 0 : index
    %c0_17 = arith.constant 0 : index
    %11 = vector.load %arg8[%c0_16, %c0_17] : memref<1x128xf32, #tpu.memory_space<vmem>>, vector<1x128xf32>
    %12 = vector.broadcast %11 : vector<1x128xf32> to vector<16x128xf32>
    %13 = arith.addf %10, %12 : vector<16x128xf32>
    %cst_18 = arith.constant dense<0.000000e+00> : vector<16x128xf32>
    %14 = tpu.matmul %3, %7, %cst_18 {dimension_numbers = #tpu.dot_dimension_numbers<[1], [0], [0], [1], [0, 0, 1, 1], [], []>} : vector<16x128xf32>, vector<128x128xf32>, vector<16x128xf32> -> vector<16x128xf32>
    %c0_19 = arith.constant 0 : index
    %c0_20 = arith.constant 0 : index
    %15 = vector.load %arg9[%c0_19, %c0_20] : memref<1x128xf32, #tpu.memory_space<vmem>>, vector<1x128xf32>
    %16 = vector.broadcast %15 : vector<1x128xf32> to vector<16x128xf32>
    %17 = arith.addf %14, %16 : vector<16x128xf32>
    %cst_21 = arith.constant dense<0.000000e+00> : vector<16x128xf32>
    %18 = tpu.matmul %5, %8, %cst_21 {dimension_numbers = #tpu.dot_dimension_numbers<[1], [0], [0], [1], [0, 0, 1, 1], [], []>} : vector<16x128xf32>, vector<128x128xf32>, vector<16x128xf32> -> vector<16x128xf32>
    %c0_22 = arith.constant 0 : index
    %c0_23 = arith.constant 0 : index
    %19 = vector.load %arg10[%c0_22, %c0_23] : memref<1x128xf32, #tpu.memory_space<vmem>>, vector<1x128xf32>
    %20 = vector.broadcast %19 : vector<1x128xf32> to vector<16x128xf32>
    %21 = arith.addf %18, %20 : vector<16x128xf32>
    %22 = vector.extract_strided_slice %13 {offsets = [0, 0], sizes = [16, 32], strides = [1, 1]} : vector<16x128xf32> to vector<16x32xf32>
    %23 = vector.extract_strided_slice %17 {offsets = [0, 0], sizes = [16, 32], strides = [1, 1]} : vector<16x128xf32> to vector<16x32xf32>
    %24 = vector.extract_strided_slice %21 {offsets = [0, 0], sizes = [16, 32], strides = [1, 1]} : vector<16x128xf32> to vector<16x32xf32>
    %cst_24 = arith.constant dense<0.000000e+00> : vector<16x16xf32>
    %25 = tpu.matmul %22, %23, %cst_24 {dimension_numbers = #tpu.dot_dimension_numbers<[1], [1], [0], [0], [0, 0, 1, 0], [], []>} : vector<16x32xf32>, vector<16x32xf32>, vector<16x16xf32> -> vector<16x16xf32>
    %cst_25 = arith.constant 0.176776692 : f32
    %26 = vector.broadcast %cst_25 : f32 to vector<16x16xf32>
    %27 = arith.mulf %25, %26 : vector<16x16xf32>
    %cst_26 = arith.constant dense<0xFF800000> : vector<16xf32>
    %28 = vector.multi_reduction <maximumf>, %27, %cst_26 [1] : vector<16x16xf32> to vector<16xf32>
    %29 = vector.shape_cast %28 : vector<16xf32> to vector<16x1xf32>
    %30 = vector.broadcast %29 : vector<16x1xf32> to vector<16x16xf32>
    %31 = arith.subf %27, %30 : vector<16x16xf32>
    %32 = math.exp %31 : vector<16x16xf32>
    %cst_27 = arith.constant dense<0.000000e+00> : vector<16xf32>
    %33 = vector.multi_reduction <add>, %32, %cst_27 [1] : vector<16x16xf32> to vector<16xf32>
    %34 = vector.shape_cast %33 : vector<16xf32> to vector<16x1xf32>
    %35 = vector.broadcast %34 : vector<16x1xf32> to vector<16x16xf32>
    %36 = arith.divf %32, %35 : vector<16x16xf32>
    %cst_28 = arith.constant dense<0.000000e+00> : vector<16x32xf32>
    %37 = tpu.matmul %36, %24, %cst_28 {dimension_numbers = #tpu.dot_dimension_numbers<[1], [0], [0], [1], [0, 0, 1, 1], [], []>} : vector<16x16xf32>, vector<16x32xf32>, vector<16x32xf32> -> vector<16x32xf32>
    %38 = vector.extract_strided_slice %13 {offsets = [0, 32], sizes = [16, 32], strides = [1, 1]} : vector<16x128xf32> to vector<16x32xf32>
    %39 = vector.extract_strided_slice %17 {offsets = [0, 32], sizes = [16, 32], strides = [1, 1]} : vector<16x128xf32> to vector<16x32xf32>
    %40 = vector.extract_strided_slice %21 {offsets = [0, 32], sizes = [16, 32], strides = [1, 1]} : vector<16x128xf32> to vector<16x32xf32>
    %cst_29 = arith.constant dense<0.000000e+00> : vector<16x16xf32>
    %41 = tpu.matmul %38, %39, %cst_29 {dimension_numbers = #tpu.dot_dimension_numbers<[1], [1], [0], [0], [0, 0, 1, 0], [], []>} : vector<16x32xf32>, vector<16x32xf32>, vector<16x16xf32> -> vector<16x16xf32>
    %cst_30 = arith.constant 0.176776692 : f32
    %42 = vector.broadcast %cst_30 : f32 to vector<16x16xf32>
    %43 = arith.mulf %41, %42 : vector<16x16xf32>
    %cst_31 = arith.constant dense<0xFF800000> : vector<16xf32>
    %44 = vector.multi_reduction <maximumf>, %43, %cst_31 [1] : vector<16x16xf32> to vector<16xf32>
    %45 = vector.shape_cast %44 : vector<16xf32> to vector<16x1xf32>
    %46 = vector.broadcast %45 : vector<16x1xf32> to vector<16x16xf32>
    %47 = arith.subf %43, %46 : vector<16x16xf32>
    %48 = math.exp %47 : vector<16x16xf32>
    %cst_32 = arith.constant dense<0.000000e+00> : vector<16xf32>
    %49 = vector.multi_reduction <add>, %48, %cst_32 [1] : vector<16x16xf32> to vector<16xf32>
    %50 = vector.shape_cast %49 : vector<16xf32> to vector<16x1xf32>
    %51 = vector.broadcast %50 : vector<16x1xf32> to vector<16x16xf32>
    %52 = arith.divf %48, %51 : vector<16x16xf32>
    %cst_33 = arith.constant dense<0.000000e+00> : vector<16x32xf32>
    %53 = tpu.matmul %52, %40, %cst_33 {dimension_numbers = #tpu.dot_dimension_numbers<[1], [0], [0], [1], [0, 0, 1, 1], [], []>} : vector<16x16xf32>, vector<16x32xf32>, vector<16x32xf32> -> vector<16x32xf32>
    %54 = vector.extract_strided_slice %13 {offsets = [0, 64], sizes = [16, 32], strides = [1, 1]} : vector<16x128xf32> to vector<16x32xf32>
    %55 = vector.extract_strided_slice %17 {offsets = [0, 64], sizes = [16, 32], strides = [1, 1]} : vector<16x128xf32> to vector<16x32xf32>
    %56 = vector.extract_strided_slice %21 {offsets = [0, 64], sizes = [16, 32], strides = [1, 1]} : vector<16x128xf32> to vector<16x32xf32>
    %cst_34 = arith.constant dense<0.000000e+00> : vector<16x16xf32>
    %57 = tpu.matmul %54, %55, %cst_34 {dimension_numbers = #tpu.dot_dimension_numbers<[1], [1], [0], [0], [0, 0, 1, 0], [], []>} : vector<16x32xf32>, vector<16x32xf32>, vector<16x16xf32> -> vector<16x16xf32>
    %cst_35 = arith.constant 0.176776692 : f32
    %58 = vector.broadcast %cst_35 : f32 to vector<16x16xf32>
    %59 = arith.mulf %57, %58 : vector<16x16xf32>
    %cst_36 = arith.constant dense<0xFF800000> : vector<16xf32>
    %60 = vector.multi_reduction <maximumf>, %59, %cst_36 [1] : vector<16x16xf32> to vector<16xf32>
    %61 = vector.shape_cast %60 : vector<16xf32> to vector<16x1xf32>
    %62 = vector.broadcast %61 : vector<16x1xf32> to vector<16x16xf32>
    %63 = arith.subf %59, %62 : vector<16x16xf32>
    %64 = math.exp %63 : vector<16x16xf32>
    %cst_37 = arith.constant dense<0.000000e+00> : vector<16xf32>
    %65 = vector.multi_reduction <add>, %64, %cst_37 [1] : vector<16x16xf32> to vector<16xf32>
    %66 = vector.shape_cast %65 : vector<16xf32> to vector<16x1xf32>
    %67 = vector.broadcast %66 : vector<16x1xf32> to vector<16x16xf32>
    %68 = arith.divf %64, %67 : vector<16x16xf32>
    %cst_38 = arith.constant dense<0.000000e+00> : vector<16x32xf32>
    %69 = tpu.matmul %68, %56, %cst_38 {dimension_numbers = #tpu.dot_dimension_numbers<[1], [0], [0], [1], [0, 0, 1, 1], [], []>} : vector<16x16xf32>, vector<16x32xf32>, vector<16x32xf32> -> vector<16x32xf32>
    %70 = vector.extract_strided_slice %13 {offsets = [0, 96], sizes = [16, 32], strides = [1, 1]} : vector<16x128xf32> to vector<16x32xf32>
    %71 = vector.extract_strided_slice %17 {offsets = [0, 96], sizes = [16, 32], strides = [1, 1]} : vector<16x128xf32> to vector<16x32xf32>
    %72 = vector.extract_strided_slice %21 {offsets = [0, 96], sizes = [16, 32], strides = [1, 1]} : vector<16x128xf32> to vector<16x32xf32>
    %cst_39 = arith.constant dense<0.000000e+00> : vector<16x16xf32>
    %73 = tpu.matmul %70, %71, %cst_39 {dimension_numbers = #tpu.dot_dimension_numbers<[1], [1], [0], [0], [0, 0, 1, 0], [], []>} : vector<16x32xf32>, vector<16x32xf32>, vector<16x16xf32> -> vector<16x16xf32>
    %cst_40 = arith.constant 0.176776692 : f32
    %74 = vector.broadcast %cst_40 : f32 to vector<16x16xf32>
    %75 = arith.mulf %73, %74 : vector<16x16xf32>
    %cst_41 = arith.constant dense<0xFF800000> : vector<16xf32>
    %76 = vector.multi_reduction <maximumf>, %75, %cst_41 [1] : vector<16x16xf32> to vector<16xf32>
    %77 = vector.shape_cast %76 : vector<16xf32> to vector<16x1xf32>
    %78 = vector.broadcast %77 : vector<16x1xf32> to vector<16x16xf32>
    %79 = arith.subf %75, %78 : vector<16x16xf32>
    %80 = math.exp %79 : vector<16x16xf32>
    %cst_42 = arith.constant dense<0.000000e+00> : vector<16xf32>
    %81 = vector.multi_reduction <add>, %80, %cst_42 [1] : vector<16x16xf32> to vector<16xf32>
    %82 = vector.shape_cast %81 : vector<16xf32> to vector<16x1xf32>
    %83 = vector.broadcast %82 : vector<16x1xf32> to vector<16x16xf32>
    %84 = arith.divf %80, %83 : vector<16x16xf32>
    %cst_43 = arith.constant dense<0.000000e+00> : vector<16x32xf32>
    %85 = tpu.matmul %84, %72, %cst_43 {dimension_numbers = #tpu.dot_dimension_numbers<[1], [0], [0], [1], [0, 0, 1, 1], [], []>} : vector<16x16xf32>, vector<16x32xf32>, vector<16x32xf32> -> vector<16x32xf32>
    %86 = tpu.concatenate %37, %53, %69, %85 in 1 : vector<16x32xf32>, vector<16x32xf32>, vector<16x32xf32>, vector<16x32xf32> -> vector<16x128xf32>
    %cst_44 = arith.constant dense<0.000000e+00> : vector<16x128xf32>
    %87 = tpu.matmul %86, %9, %cst_44 {dimension_numbers = #tpu.dot_dimension_numbers<[1], [0], [0], [1], [0, 0, 1, 1], [], []>} : vector<16x128xf32>, vector<128x128xf32>, vector<16x128xf32> -> vector<16x128xf32>
    %c0_45 = arith.constant 0 : index
    %c0_46 = arith.constant 0 : index
    %88 = vector.load %arg11[%c0_45, %c0_46] : memref<1x128xf32, #tpu.memory_space<vmem>>, vector<1x128xf32>
    %89 = vector.broadcast %88 : vector<1x128xf32> to vector<16x128xf32>
    %90 = arith.addf %87, %89 : vector<16x128xf32>
    %c0_47 = arith.constant 0 : index
    %c0_48 = arith.constant 0 : index
    %c0_49 = arith.constant 0 : index
    %91 = vector.load %arg12[%c0_47, %c0_48, %c0_49] : memref<1x16x128xf32, #tpu.memory_space<vmem>>, vector<1x16x128xf32>
    %92 = vector.shape_cast %91 : vector<1x16x128xf32> to vector<16x128xf32>
    %93 = vector.shape_cast %90 : vector<16x128xf32> to vector<1x16x128xf32>
    tpu.vector_store %arg12[%c0_47, %c0_48, %c0_49], %93 {strides = array<i32>} : memref<1x16x128xf32, #tpu.memory_space<vmem>>, vector<1x16x128xf32>,
    return
  }
  func.func @transform_0(%arg0: i32) -> (i32, i32, i32) {
    %c0_i32 = arith.constant 0 : i32
    %c0_i32_0 = arith.constant 0 : i32
    %c0_i32_1 = arith.constant 0 : i32
    return %arg0, %c0_i32, %c0_i32_0 : i32, i32, i32
  }
  func.func @transform_1(%arg0: i32) -> (i32, i32, i32) {
    %c0_i32 = arith.constant 0 : i32
    %c0_i32_0 = arith.constant 0 : i32
    %c0_i32_1 = arith.constant 0 : i32
    return %arg0, %c0_i32, %c0_i32_0 : i32, i32, i32
  }
  func.func @transform_2(%arg0: i32) -> (i32, i32, i32) {
    %c0_i32 = arith.constant 0 : i32
    %c0_i32_0 = arith.constant 0 : i32
    %c0_i32_1 = arith.constant 0 : i32
    return %arg0, %c0_i32, %c0_i32_0 : i32, i32, i32
  }
  func.func @transform_3(%arg0: i32) -> (i32, i32) {
    %c0_i32 = arith.constant 0 : i32
    %c0_i32_0 = arith.constant 0 : i32
    %c0_i32_1 = arith.constant 0 : i32
    return %c0_i32, %c0_i32_0 : i32, i32
  }
  func.func @transform_4(%arg0: i32) -> (i32, i32) {
    %c0_i32 = arith.constant 0 : i32
    %c0_i32_0 = arith.constant 0 : i32
    %c0_i32_1 = arith.constant 0 : i32
    return %c0_i32, %c0_i32_0 : i32, i32
  }
  func.func @transform_5(%arg0: i32) -> (i32, i32) {
    %c0_i32 = arith.constant 0 : i32
    %c0_i32_0 = arith.constant 0 : i32
    %c0_i32_1 = arith.constant 0 : i32
    return %c0_i32, %c0_i32_0 : i32, i32
  }
  func.func @transform_6(%arg0: i32) -> (i32, i32) {
    %c0_i32 = arith.constant 0 : i32
    %c0_i32_0 = arith.constant 0 : i32
    %c0_i32_1 = arith.constant 0 : i32
    return %c0_i32, %c0_i32_0 : i32, i32
  }
  func.func @transform_7(%arg0: i32) -> (i32, i32) {
    %c0_i32 = arith.constant 0 : i32
    %c0_i32_0 = arith.constant 0 : i32
    %c0_i32_1 = arith.constant 0 : i32
    return %c0_i32, %c0_i32_0 : i32, i32
  }
  func.func @transform_8(%arg0: i32) -> (i32, i32) {
    %c0_i32 = arith.constant 0 : i32
    %c0_i32_0 = arith.constant 0 : i32
    %c0_i32_1 = arith.constant 0 : i32
    return %c0_i32, %c0_i32_0 : i32, i32
  }
  func.func @transform_9(%arg0: i32) -> (i32, i32) {
    %c0_i32 = arith.constant 0 : i32
    %c0_i32_0 = arith.constant 0 : i32
    %c0_i32_1 = arith.constant 0 : i32
    return %c0_i32, %c0_i32_0 : i32, i32
  }
  func.func @transform_10(%arg0: i32) -> (i32, i32) {
    %c0_i32 = arith.constant 0 : i32
    %c0_i32_0 = arith.constant 0 : i32
    %c0_i32_1 = arith.constant 0 : i32
    return %c0_i32, %c0_i32_0 : i32, i32
  }
  func.func @transform_11(%arg0: i32) -> (i32, i32, i32) {
    %c0_i32 = arith.constant 0 : i32
    %c0_i32_0 = arith.constant 0 : i32
    %c0_i32_1 = arith.constant 0 : i32
    return %arg0, %c0_i32, %c0_i32_0 : i32, i32, i32
  }
}

</mosaic_0001>

<llo_original>
// kernel: tpu_custom_call.1
$region0: #{tpu_custom_call.1}
  #allocation0 [shape = 'u32[]', space=smem, size = 0x4, offset = 0x4, fixed_abs, tag = 'smem constant byte address 0x4 - core index']
  #allocation1 [shape = 'u32[144,128]{1,0:T(1,128)}', space=vmem, size = 0x12000, scoped, tag = 'internal scratch']
  %s0 = inlined_call_operand.hbm [shape: f32[2,16,128], index: 0, kind: input, shape index: {}]
  %s1 = inlined_call_operand.hbm [shape: f32[2,16,128], index: 1, kind: input, shape index: {}]
  %s2 = inlined_call_operand.hbm [shape: f32[2,16,128], index: 2, kind: input, shape index: {}]
  %s3 = inlined_call_operand.hbm [shape: f32[128,128], index: 3, kind: input, shape index: {}]
  %s4 = inlined_call_operand.hbm [shape: f32[128,128], index: 4, kind: input, shape index: {}]
  %s5 = inlined_call_operand.hbm [shape: f32[128,128], index: 5, kind: input, shape index: {}]
  %s6 = inlined_call_operand.hbm [shape: f32[128,128], index: 6, kind: input, shape index: {}]
  %s7 = inlined_call_operand.vmem [shape: f32[1,128], index: 7, kind: input, shape index: {}]
  %s8 = inlined_call_operand.vmem [shape: f32[1,128], index: 8, kind: input, shape index: {}]
  %s9 = inlined_call_operand.vmem [shape: f32[1,128], index: 9, kind: input, shape index: {}]
  %s10 = inlined_call_operand.vmem [shape: f32[1,128], index: 10, kind: input, shape index: {}]
  %s11 = inlined_call_operand.hbm [shape: f32[2,16,128], index: 11, kind: output, shape index: {}]
  %s12 = sld [smem:[#allocation0]]
  $region105: #{tpu_custom_call.1} parent=0
    _
  %s14 = ssub.s32 1, %s12
  %s15 = scalar_select 0, %s14, %s12
  $region1: #{tpu_custom_call.1} parent=0
    #allocation2 [shape = 'u8[16384]{0}', space=vmem, size = 0x4000, scoped, tag = 'input window, operand 0']
    #allocation3 [shape = 's32[2]{0}', space=sflag, size = 0x8, scoped, tag = 'scoped memory for tpu_custom_call.1']
    #allocation4 [shape = 's32[2]{0}', space=sflag, size = 0x8, scoped, tag = 'scoped memory for tpu_custom_call.1']
    #allocation5 [shape = 'u8[16384]{0}', space=vmem, size = 0x4000, scoped, tag = 'input window, operand 1']
    #allocation6 [shape = 's32[2]{0}', space=sflag, size = 0x8, scoped, tag = 'scoped memory for tpu_custom_call.1']
    #allocation7 [shape = 'u8[16384]{0}', space=vmem, size = 0x4000, scoped, tag = 'input window, operand 2']
    #allocation8 [shape = 'u8[65536]{0}', space=vmem, size = 0x10000, scoped, tag = 'input window, operand 3, single buffered']
    #allocation9 [shape = 's32[1]{0}', space=sflag, size = 0x4, scoped, tag = 'scoped memory for tpu_custom_call.1']
    #allocation10 [shape = 'u8[65536]{0}', space=vmem, size = 0x10000, scoped, tag = 'input window, operand 4, single buffered']
    #allocation11 [shape = 'u8[65536]{0}', space=vmem, size = 0x10000, scoped, tag = 'input window, operand 5, single buffered']
    #allocation12 [shape = 's32[1]{0}', space=sflag, size = 0x4, scoped, tag = 'scoped memory for tpu_custom_call.1']
    #allocation13 [shape = 'u8[65536]{0}', space=vmem, size = 0x10000, scoped, tag = 'input window, operand 6, single buffered']
    #allocation14 [shape = 'u8[16384]{0}', space=vmem, size = 0x4000, scoped, tag = 'output window, operand 0']
    %16 = vsyncpa [#allocation3], 0
    %s17 = scalar_lea.sflag [#allocation3], 1
    %18 = vsyncpa %s17, 0
    %19 = vsyncpa [#allocation6], 0
    %s20 = scalar_lea.sflag [#allocation6], 1
    %21 = vsyncpa %s20, 0
    %22 = vsyncpa [#allocation9], 0
    %23 = vsyncpa [#allocation12], 0
    %24 = vsyncpa [#allocation4], 0
    %s25 = scalar_lea.sflag [#allocation4], 1
    %26 = vsyncpa %s25, 0
    loop: start=0, step=1, limit=4
    $region2: #{tpu_custom_call.1} parent=1 // loop_pre_header
      _
    $region3: #{tpu_custom_call.1} parent=1 // loop_header
      %s28 = sphi 0, %s32
      %p29 = scmp.ge.s32.totalorder %s28, 4
      %s38 = sphi 0, %s40
      %s41 = sphi 0, %s38
      %s42 = sphi 0, %s41
      %s58 = sphi 0, %s42
      %s64 = sphi 0, %s66
      %s67 = sphi 0, %s64
      %s68 = sphi 0, %s67
      %s84 = sphi 0, %s68
      %s90 = sphi 0, %s92
      %s93 = sphi 0, %s90
      %s94 = sphi 0, %s93
      %s110 = sphi 0, %s94
      %s114 = sphi 0, %s114
      %s116 = sphi 0, %s114
      %s117 = sphi 0, %s116
      %s131 = sphi 0, %s117
      %s135 = sphi 0, %s135
      %s137 = sphi 0, %s135
      %s138 = sphi 0, %s137
      %s152 = sphi 0, %s138
      %s156 = sphi 0, %s156
      %s158 = sphi 0, %s156
      %s159 = sphi 0, %s158
      %s173 = sphi 0, %s159
      %s177 = sphi 0, %s177
      %s179 = sphi 0, %s177
      %s180 = sphi 0, %s179
      %s194 = sphi 0, %s180
      %s198 = sphi 0, %s198
      %s200 = sphi 0, %s198
      %s201 = sphi 0, %s200
      %s215 = sphi 0, %s201
      %s219 = sphi 0, %s219
      %s221 = sphi 0, %s219
      %s222 = sphi 0, %s221
      %s236 = sphi 0, %s222
      %s240 = sphi 0, %s240
      %s242 = sphi 0, %s240
      %s243 = sphi 0, %s242
      %s257 = sphi 0, %s243
      %s261 = sphi 0, %s261
      %s263 = sphi 0, %s261
      %s264 = sphi 0, %s263
      %s278 = sphi 0, %s264
      %s284 = sphi 0, %s286
      %s287 = sphi 0, %s284
      %s288 = sphi 0, %s287
      %s304 = sphi 0, %s288
    $region4: #{tpu_custom_call.1} parent=1 // loop_header_branch
      %31 = sbr.rel (%p29) target = $region8
    $region5: #{tpu_custom_call.1} parent=1 // loop_body
      %s33 = ssub.s32 %s28, 1
      %s34 = ssub.s32 %s28, 2
      %s35 = sadd.s32 %s28, 1
      %s36 = ssub.s32 %s28, %s35
      %p37 = scmp.eq.s32.totalorder %s36, 0
      %s39 = sadd.s32 %s38, 1
      %s40 = scalar_select %p37, %s38, %s39
      %p43 = pneg %p37
      %p44 = scmp.eq.s32.totalorder %s28, 1
      %p45 = por %p43, %p44
      %p46 = scmp.ne.s32.totalorder %s38, %s41
      %p47 = scmp.eq.s32.totalorder %s28, 0
      %p48 = por %p46, %p47
      %p49 = scmp.ne.s32.totalorder %s38, %s41
      %p50 = scmp.eq.s32.totalorder %s33, 1
      %p51 = por %p49, %p50
      %p52 = scmp.ne.s32.totalorder %s41, %s42
      %p53 = scmp.eq.s32.totalorder %s33, 0
      %p54 = por %p52, %p53
      %p55 = scmp.ne.s32.totalorder %s41, %s42
      %p56 = scmp.eq.s32.totalorder %s34, 1
      %p57 = por %p55, %p56
      %p59 = scmp.ne.s32.totalorder %s42, %s58
      %p60 = scmp.eq.s32.totalorder %s34, 0
      %p61 = por %p59, %p60
      %s62 = ssub.s32 %s28, %s35
      %p63 = scmp.eq.s32.totalorder %s62, 0
      %s65 = sadd.s32 %s64, 1
      %s66 = scalar_select %p63, %s64, %s65
      %p69 = pneg %p63
      %p70 = scmp.eq.s32.totalorder %s28, 1
      %p71 = por %p69, %p70
      %p72 = scmp.ne.s32.totalorder %s64, %s67
      %p73 = scmp.eq.s32.totalorder %s28, 0
      %p74 = por %p72, %p73
      %p75 = scmp.ne.s32.totalorder %s64, %s67
      %p76 = scmp.eq.s32.totalorder %s33, 1
      %p77 = por %p75, %p76
      %p78 = scmp.ne.s32.totalorder %s67, %s68
      %p79 = scmp.eq.s32.totalorder %s33, 0
      %p80 = por %p78, %p79
      %p81 = scmp.ne.s32.totalorder %s67, %s68
      %p82 = scmp.eq.s32.totalorder %s34, 1
      %p83 = por %p81, %p82
      %p85 = scmp.ne.s32.totalorder %s68, %s84
      %p86 = scmp.eq.s32.totalorder %s34, 0
      %p87 = por %p85, %p86
      %s88 = ssub.s32 %s28, %s35
      %p89 = scmp.eq.s32.totalorder %s88, 0
      %s91 = sadd.s32 %s90, 1
      %s92 = scalar_select %p89, %s90, %s91
      %p95 = pneg %p89
      %p96 = scmp.eq.s32.totalorder %s28, 1
      %p97 = por %p95, %p96
      %p98 = scmp.ne.s32.totalorder %s90, %s93
      %p99 = scmp.eq.s32.totalorder %s28, 0
      %p100 = por %p98, %p99
      %p101 = scmp.ne.s32.totalorder %s90, %s93
      %p102 = scmp.eq.s32.totalorder %s33, 1
      %p103 = por %p101, %p102
      %p104 = scmp.ne.s32.totalorder %s93, %s94
      %p105 = scmp.eq.s32.totalorder %s33, 0
      %p106 = por %p104, %p105
      %p107 = scmp.ne.s32.totalorder %s93, %s94
      %p108 = scmp.eq.s32.totalorder %s34, 1
      %p109 = por %p107, %p108
      %p111 = scmp.ne.s32.totalorder %s94, %s110
      %p112 = scmp.eq.s32.totalorder %s34, 0
      %p113 = por %p111, %p112
      %s115 = sadd.s32 %s114, 1
      %p118 = scmp.eq.s32.totalorder %s28, 1
      %p119 = scmp.ne.s32.totalorder %s114, %s116
      %p120 = scmp.eq.s32.totalorder %s28, 0
      %p121 = por %p119, %p120
      %p122 = scmp.ne.s32.totalorder %s114, %s116
      %p123 = scmp.eq.s32.totalorder %s33, 1
      %p124 = por %p122, %p123
      %p125 = scmp.ne.s32.totalorder %s116, %s117
      %p126 = scmp.eq.s32.totalorder %s33, 0
      %p127 = por %p125, %p126
      %p128 = scmp.ne.s32.totalorder %s116, %s117
      %p129 = scmp.eq.s32.totalorder %s34, 1
      %p130 = por %p128, %p129
      %p132 = scmp.ne.s32.totalorder %s117, %s131
      %p133 = scmp.eq.s32.totalorder %s34, 0
      %p134 = por %p132, %p133
      %s136 = sadd.s32 %s135, 1
      %p139 = scmp.eq.s32.totalorder %s28, 1
      %p140 = scmp.ne.s32.totalorder %s135, %s137
      %p141 = scmp.eq.s32.totalorder %s28, 0
      %p142 = por %p140, %p141
      %p143 = scmp.ne.s32.totalorder %s135, %s137
      %p144 = scmp.eq.s32.totalorder %s33, 1
      %p145 = por %p143, %p144
      %p146 = scmp.ne.s32.totalorder %s137, %s138
      %p147 = scmp.eq.s32.totalorder %s33, 0
      %p148 = por %p146, %p147
      %p149 = scmp.ne.s32.totalorder %s137, %s138
      %p150 = scmp.eq.s32.totalorder %s34, 1
      %p151 = por %p149, %p150
      %p153 = scmp.ne.s32.totalorder %s138, %s152
      %p154 = scmp.eq.s32.totalorder %s34, 0
      %p155 = por %p153, %p154
      %s157 = sadd.s32 %s156, 1
      %p160 = scmp.eq.s32.totalorder %s28, 1
      %p161 = scmp.ne.s32.totalorder %s156, %s158
      %p162 = scmp.eq.s32.totalorder %s28, 0
      %p163 = por %p161, %p162
      %p164 = scmp.ne.s32.totalorder %s156, %s158
      %p165 = scmp.eq.s32.totalorder %s33, 1
      %p166 = por %p164, %p165
      %p167 = scmp.ne.s32.totalorder %s158, %s159
      %p168 = scmp.eq.s32.totalorder %s33, 0
      %p169 = por %p167, %p168
      %p170 = scmp.ne.s32.totalorder %s158, %s159
      %p171 = scmp.eq.s32.totalorder %s34, 1
      %p172 = por %p170, %p171
      %p174 = scmp.ne.s32.totalorder %s159, %s173
      %p175 = scmp.eq.s32.totalorder %s34, 0
      %p176 = por %p174, %p175
      %s178 = sadd.s32 %s177, 1
      %p181 = scmp.eq.s32.totalorder %s28, 1
      %p182 = scmp.ne.s32.totalorder %s177, %s179
      %p183 = scmp.eq.s32.totalorder %s28, 0
      %p184 = por %p182, %p183
      %p185 = scmp.ne.s32.totalorder %s177, %s179
      %p186 = scmp.eq.s32.totalorder %s33, 1
      %p187 = por %p185, %p186
      %p188 = scmp.ne.s32.totalorder %s179, %s180
      %p189 = scmp.eq.s32.totalorder %s33, 0
      %p190 = por %p188, %p189
      %p191 = scmp.ne.s32.totalorder %s179, %s180
      %p192 = scmp.eq.s32.totalorder %s34, 1
      %p193 = por %p191, %p192
      %p195 = scmp.ne.s32.totalorder %s180, %s194
      %p196 = scmp.eq.s32.totalorder %s34, 0
      %p197 = por %p195, %p196
      %s199 = sadd.s32 %s198, 1
      %p202 = scmp.eq.s32.totalorder %s28, 1
      %p203 = scmp.ne.s32.totalorder %s198, %s200
      %p204 = scmp.eq.s32.totalorder %s28, 0
      %p205 = por %p203, %p204
      %p206 = scmp.ne.s32.totalorder %s198, %s200
      %p207 = scmp.eq.s32.totalorder %s33, 1
      %p208 = por %p206, %p207
      %p209 = scmp.ne.s32.totalorder %s200, %s201
      %p210 = scmp.eq.s32.totalorder %s33, 0
      %p211 = por %p209, %p210
      %p212 = scmp.ne.s32.totalorder %s200, %s201
      %p213 = scmp.eq.s32.totalorder %s34, 1
      %p214 = por %p212, %p213
      %p216 = scmp.ne.s32.totalorder %s201, %s215
      %p217 = scmp.eq.s32.totalorder %s34, 0
      %p218 = por %p216, %p217
      %s220 = sadd.s32 %s219, 1
      %p223 = scmp.eq.s32.totalorder %s28, 1
      %p224 = scmp.ne.s32.totalorder %s219, %s221
      %p225 = scmp.eq.s32.totalorder %s28, 0
      %p226 = por %p224, %p225
      %p227 = scmp.ne.s32.totalorder %s219, %s221
      %p228 = scmp.eq.s32.totalorder %s33, 1
      %p229 = por %p227, %p228
      %p230 = scmp.ne.s32.totalorder %s221, %s222
      %p231 = scmp.eq.s32.totalorder %s33, 0
      %p232 = por %p230, %p231
      %p233 = scmp.ne.s32.totalorder %s221, %s222
      %p234 = scmp.eq.s32.totalorder %s34, 1
      %p235 = por %p233, %p234
      %p237 = scmp.ne.s32.totalorder %s222, %s236
      %p238 = scmp.eq.s32.totalorder %s34, 0
      %p239 = por %p237, %p238
      %s241 = sadd.s32 %s240, 1
      %p244 = scmp.eq.s32.totalorder %s28, 1
      %p245 = scmp.ne.s32.totalorder %s240, %s242
      %p246 = scmp.eq.s32.totalorder %s28, 0
      %p247 = por %p245, %p246
      %p248 = scmp.ne.s32.totalorder %s240, %s242
      %p249 = scmp.eq.s32.totalorder %s33, 1
      %p250 = por %p248, %p249
      %p251 = scmp.ne.s32.totalorder %s242, %s243
      %p252 = scmp.eq.s32.totalorder %s33, 0
      %p253 = por %p251, %p252
      %p254 = scmp.ne.s32.totalorder %s242, %s243
      %p255 = scmp.eq.s32.totalorder %s34, 1
      %p256 = por %p254, %p255
      %p258 = scmp.ne.s32.totalorder %s243, %s257
      %p259 = scmp.eq.s32.totalorder %s34, 0
      %p260 = por %p258, %p259
      %s262 = sadd.s32 %s261, 1
      %p265 = scmp.eq.s32.totalorder %s28, 1
      %p266 = scmp.ne.s32.totalorder %s261, %s263
      %p267 = scmp.eq.s32.totalorder %s28, 0
      %p268 = por %p266, %p267
      %p269 = scmp.ne.s32.totalorder %s261, %s263
      %p270 = scmp.eq.s32.totalorder %s33, 1
      %p271 = por %p269, %p270
      %p272 = scmp.ne.s32.totalorder %s263, %s264
      %p273 = scmp.eq.s32.totalorder %s33, 0
      %p274 = por %p272, %p273
      %p275 = scmp.ne.s32.totalorder %s263, %s264
      %p276 = scmp.eq.s32.totalorder %s34, 1
      %p277 = por %p275, %p276
      %p279 = scmp.ne.s32.totalorder %s264, %s278
      %p280 = scmp.eq.s32.totalorder %s34, 0
      %p281 = por %p279, %p280
      %s282 = ssub.s32 %s28, %s35
      %p283 = scmp.eq.s32.totalorder %s282, 0
      %s285 = sadd.s32 %s284, 1
      %s286 = scalar_select %p283, %s284, %s285
      %p289 = pneg %p283
      %p290 = scmp.eq.s32.totalorder %s28, 1
      %p291 = por %p289, %p290
      %p292 = scmp.ne.s32.totalorder %s284, %s287
      %p293 = scmp.eq.s32.totalorder %s28, 0
      %p294 = por %p292, %p293
      %p295 = scmp.ne.s32.totalorder %s284, %s287
      %p296 = scmp.eq.s32.totalorder %s33, 1
      %p297 = por %p295, %p296
      %p298 = scmp.ne.s32.totalorder %s287, %s288
      %p299 = scmp.eq.s32.totalorder %s33, 0
      %p300 = por %p298, %p299
      %p301 = scmp.ne.s32.totalorder %s287, %s288
      %p302 = scmp.eq.s32.totalorder %s34, 1
      %p303 = por %p301, %p302
      %p305 = scmp.ne.s32.totalorder %s288, %s304
      %p306 = scmp.eq.s32.totalorder %s34, 0
      %p307 = por %p305, %p306
      %p308 = scmp.le.s32.totalorder 1, %s28
      %p309 = scmp.lt.s32.totalorder %s28, 3
      %p310 = pnand %p308, %p309
      %p311 = pneg %p310
      // Predicated region
      $region9: #{tpu_custom_call.1} parent=5 // pred_check
        _
      $region10: #{tpu_custom_call.1} parent=5 // pred_check_branch
        %313 = sbr.rel (%p310) target = $region12
      $region11: #{tpu_custom_call.1} parent=5 // pred_region
        %s314 = ssub.s32 %s28, 1
        // Predicated region
        $region13: #{tpu_custom_call.1} parent=11 // pred_check
          %p315 = pneg %p127
        $region14: #{tpu_custom_call.1} parent=11 // pred_check_branch
          %317 = sbr.rel (%p315) target = $region16
        $region15: #{tpu_custom_call.1} parent=11 // pred_region
          %s319 = ssub.s32 2048, 2048
          %320 = vsyncadd [#allocation9], %s319
          %s321 = sshll.u32 [#allocation8], 4
          %s322 = int_to_ptr.vmem [resolvable:$true] %s321
          %327 = dma.hbm_to_vmem [thread:$0]  %s3, 2048, %s322, [#allocation9], 128, 128, 8
        $region16: #{tpu_custom_call.1} parent=11 // pred_fallthru
          _
        // Predicated region
        $region17: #{tpu_custom_call.1} parent=11 // pred_check
          %p328 = pneg %p148
        $region18: #{tpu_custom_call.1} parent=11 // pred_check_branch
          %330 = sbr.rel (%p328) target = $region20
        $region19: #{tpu_custom_call.1} parent=11 // pred_region
          %s332 = ssub.s32 2048, 2048
          %333 = vsyncadd [#allocation9], %s332
          %s334 = sshll.u32 [#allocation10], 4
          %s335 = int_to_ptr.vmem [resolvable:$true] %s334
          %340 = dma.hbm_to_vmem [thread:$0]  %s4, 2048, %s335, [#allocation9], 128, 128, 8
        $region20: #{tpu_custom_call.1} parent=11 // pred_fallthru
          _
        // Predicated region
        $region21: #{tpu_custom_call.1} parent=11 // pred_check
          %p341 = pneg %p169
        $region22: #{tpu_custom_call.1} parent=11 // pred_check_branch
          %343 = sbr.rel (%p341) target = $region24
        $region23: #{tpu_custom_call.1} parent=11 // pred_region
          %s345 = ssub.s32 2048, 2048
          %346 = vsyncadd [#allocation12], %s345
          %s347 = sshll.u32 [#allocation11], 4
          %s348 = int_to_ptr.vmem [resolvable:$true] %s347
          %353 = dma.hbm_to_vmem [thread:$0]  %s5, 2048, %s348, [#allocation12], 128, 128, 8
        $region24: #{tpu_custom_call.1} parent=11 // pred_fallthru
          _
        // Predicated region
        $region25: #{tpu_custom_call.1} parent=11 // pred_check
          %p354 = pneg %p190
        $region26: #{tpu_custom_call.1} parent=11 // pred_check_branch
          %356 = sbr.rel (%p354) target = $region28
        $region27: #{tpu_custom_call.1} parent=11 // pred_region
          %s358 = ssub.s32 2048, 2048
          %359 = vsyncadd [#allocation12], %s358
          %s360 = sshll.u32 [#allocation13], 4
          %s361 = int_to_ptr.vmem [resolvable:$true] %s360
          %366 = dma.hbm_to_vmem [thread:$0]  %s6, 2048, %s361, [#allocation12], 128, 128, 8
        $region28: #{tpu_custom_call.1} parent=11 // pred_fallthru
          _
        // Predicated region
        $region29: #{tpu_custom_call.1} parent=11 // pred_check
          %p367 = pneg %p211
        $region30: #{tpu_custom_call.1} parent=11 // pred_check_branch
          %369 = sbr.rel (%p367) target = $region32
        $region31: #{tpu_custom_call.1} parent=11 // pred_region
          _
        $region32: #{tpu_custom_call.1} parent=11 // pred_fallthru
          _
        // Predicated region
        $region33: #{tpu_custom_call.1} parent=11 // pred_check
          %p370 = pneg %p232
        $region34: #{tpu_custom_call.1} parent=11 // pred_check_branch
          %372 = sbr.rel (%p370) target = $region36
        $region35: #{tpu_custom_call.1} parent=11 // pred_region
          _
        $region36: #{tpu_custom_call.1} parent=11 // pred_fallthru
          _
        // Predicated region
        $region37: #{tpu_custom_call.1} parent=11 // pred_check
          %p373 = pneg %p253
        $region38: #{tpu_custom_call.1} parent=11 // pred_check_branch
          %375 = sbr.rel (%p373) target = $region40
        $region39: #{tpu_custom_call.1} parent=11 // pred_region
          _
        $region40: #{tpu_custom_call.1} parent=11 // pred_fallthru
          _
        // Predicated region
        $region41: #{tpu_custom_call.1} parent=11 // pred_check
          %p376 = pneg %p274
        $region42: #{tpu_custom_call.1} parent=11 // pred_check_branch
          %378 = sbr.rel (%p376) target = $region44
        $region43: #{tpu_custom_call.1} parent=11 // pred_region
          _
        $region44: #{tpu_custom_call.1} parent=11 // pred_fallthru
          _
      $region12: #{tpu_custom_call.1} parent=5 // pred_fallthru
        _
      %p379 = scmp.lt.s32.totalorder %s28, 2
      // Predicated region
      $region45: #{tpu_custom_call.1} parent=5 // pred_check
        %p380 = pneg %p379
      $region46: #{tpu_custom_call.1} parent=5 // pred_check_branch
        %382 = sbr.rel (%p380) target = $region48
      $region47: #{tpu_custom_call.1} parent=5 // pred_region
        // Predicated region
        $region49: #{tpu_custom_call.1} parent=47 // pred_check
          %p383 = pneg %p48
        $region50: #{tpu_custom_call.1} parent=47 // pred_check_branch
          %385 = sbr.rel (%p383) target = $region52
        $region51: #{tpu_custom_call.1} parent=47 // pred_region
          %s386 = sand.u32 %s38, 1
          %s387 = scalar_lea.sflag [#allocation3], %s386
          %s388 = sand.u32 %s38, 1
          %s389 = smul.addr %s388, 16
          %s390 = scalar_lea.vmem [#allocation2], %s389
          %s392 = ssub.s32 256, 256
          %393 = vsyncadd %s387, %s392
          %s394 = smul.addr %s28, 2
          %s395 = smul.addr %s394, 128
          %s396 = scalar_lea.hbm %s0, %s395
          %s397 = sshll.u32 %s390, 4
          %s398 = int_to_ptr.vmem [resolvable:$true] %s397
          %403 = dma.hbm_to_vmem [thread:$0]  %s396, 256, %s398, %s387, 128, 128, 8
        $region52: #{tpu_custom_call.1} parent=47 // pred_fallthru
          _
        // Predicated region
        $region53: #{tpu_custom_call.1} parent=47 // pred_check
          %p404 = pneg %p74
        $region54: #{tpu_custom_call.1} parent=47 // pred_check_branch
          %406 = sbr.rel (%p404) target = $region56
        $region55: #{tpu_custom_call.1} parent=47 // pred_region
          %s407 = sand.u32 %s28, 1
          %s408 = scalar_lea.sflag [#allocation6], %s407
          %s409 = sand.u32 %s64, 1
          %s410 = smul.addr %s409, 16
          %s411 = scalar_lea.vmem [#allocation5], %s410
          %s413 = ssub.s32 256, 256
          %414 = vsyncadd %s408, %s413
          %s415 = smul.addr %s28, 2
          %s416 = smul.addr %s415, 128
          %s417 = scalar_lea.hbm %s1, %s416
          %s418 = sshll.u32 %s411, 4
          %s419 = int_to_ptr.vmem [resolvable:$true] %s418
          %424 = dma.hbm_to_vmem [thread:$0]  %s417, 256, %s419, %s408, 128, 128, 8
        $region56: #{tpu_custom_call.1} parent=47 // pred_fallthru
          _
        // Predicated region
        $region57: #{tpu_custom_call.1} parent=47 // pred_check
          %p425 = pneg %p100
        $region58: #{tpu_custom_call.1} parent=47 // pred_check_branch
          %427 = sbr.rel (%p425) target = $region60
        $region59: #{tpu_custom_call.1} parent=47 // pred_region
          %s428 = sand.u32 %s28, 1
          %s429 = scalar_lea.sflag [#allocation6], %s428
          %s430 = sand.u32 %s90, 1
          %s431 = smul.addr %s430, 16
          %s432 = scalar_lea.vmem [#allocation7], %s431
          %s434 = ssub.s32 256, 256
          %435 = vsyncadd %s429, %s434
          %s436 = smul.addr %s28, 2
          %s437 = smul.addr %s436, 128
          %s438 = scalar_lea.hbm %s2, %s437
          %s439 = sshll.u32 %s432, 4
          %s440 = int_to_ptr.vmem [resolvable:$true] %s439
          %445 = dma.hbm_to_vmem [thread:$0]  %s438, 256, %s440, %s429, 128, 128, 8
        $region60: #{tpu_custom_call.1} parent=47 // pred_fallthru
          _
      $region48: #{tpu_custom_call.1} parent=5 // pred_fallthru
        _
      %p446 = scmp.le.s32.totalorder 1, %s28
      %p447 = scmp.lt.s32.totalorder %s28, 3
      %p448 = pnand %p446, %p447
      %p449 = pneg %p448
      // Predicated region
      $region61: #{tpu_custom_call.1} parent=5 // pred_check
        _
      $region62: #{tpu_custom_call.1} parent=5 // pred_check_branch
        %451 = sbr.rel (%p448) target = $region64
      $region63: #{tpu_custom_call.1} parent=5 // pred_region
        %s452 = ssub.s32 %s28, 1
        %s453 = sand.u32 %s41, 1
        %s454 = scalar_lea.sflag [#allocation3], %s453
        %s455 = sand.u32 %s41, 1
        %s456 = smul.addr %s455, 16
        %s457 = scalar_lea.vmem [#allocation2], %s456
        // Predicated region
        $region65: #{tpu_custom_call.1} parent=63 // pred_check
          %p458 = pneg %p54
        $region66: #{tpu_custom_call.1} parent=63 // pred_check_branch
          %460 = sbr.rel (%p458) target = $region68
        $region67: #{tpu_custom_call.1} parent=63 // pred_region
          %461 = dma.done %s454, 256
        $region68: #{tpu_custom_call.1} parent=63 // pred_fallthru
          _
        %s462 = sand.u32 %s33, 1
        %s463 = scalar_lea.sflag [#allocation6], %s462
        %s464 = sand.u32 %s67, 1
        %s465 = smul.addr %s464, 16
        %s466 = scalar_lea.vmem [#allocation5], %s465
        // Predicated region
        $region69: #{tpu_custom_call.1} parent=63 // pred_check
          %p467 = pneg %p80
        $region70: #{tpu_custom_call.1} parent=63 // pred_check_branch
          %469 = sbr.rel (%p467) target = $region72
        $region71: #{tpu_custom_call.1} parent=63 // pred_region
          %470 = dma.done %s463, 256
        $region72: #{tpu_custom_call.1} parent=63 // pred_fallthru
          _
        %s471 = sand.u32 %s33, 1
        %s472 = scalar_lea.sflag [#allocation6], %s471
        %s473 = sand.u32 %s93, 1
        %s474 = smul.addr %s473, 16
        %s475 = scalar_lea.vmem [#allocation7], %s474
        // Predicated region
        $region73: #{tpu_custom_call.1} parent=63 // pred_check
          %p476 = pneg %p106
        $region74: #{tpu_custom_call.1} parent=63 // pred_check_branch
          %478 = sbr.rel (%p476) target = $region76
        $region75: #{tpu_custom_call.1} parent=63 // pred_region
          %479 = dma.done %s472, 256
        $region76: #{tpu_custom_call.1} parent=63 // pred_fallthru
          _
        // Predicated region
        $region77: #{tpu_custom_call.1} parent=63 // pred_check
          %p480 = pneg %p127
        $region78: #{tpu_custom_call.1} parent=63 // pred_check_branch
          %482 = sbr.rel (%p480) target = $region80
        $region79: #{tpu_custom_call.1} parent=63 // pred_region
          %483 = dma.done [#allocation9], 2048
        $region80: #{tpu_custom_call.1} parent=63 // pred_fallthru
          _
        // Predicated region
        $region81: #{tpu_custom_call.1} parent=63 // pred_check
          %p484 = pneg %p148
        $region82: #{tpu_custom_call.1} parent=63 // pred_check_branch
          %486 = sbr.rel (%p484) target = $region84
        $region83: #{tpu_custom_call.1} parent=63 // pred_region
          %487 = dma.done [#allocation9], 2048
        $region84: #{tpu_custom_call.1} parent=63 // pred_fallthru
          _
        // Predicated region
        $region85: #{tpu_custom_call.1} parent=63 // pred_check
          %p488 = pneg %p169
        $region86: #{tpu_custom_call.1} parent=63 // pred_check_branch
          %490 = sbr.rel (%p488) target = $region88
        $region87: #{tpu_custom_call.1} parent=63 // pred_region
          %491 = dma.done [#allocation12], 2048
        $region88: #{tpu_custom_call.1} parent=63 // pred_fallthru
          _
        // Predicated region
        $region89: #{tpu_custom_call.1} parent=63 // pred_check
          %p492 = pneg %p190
        $region90: #{tpu_custom_call.1} parent=63 // pred_check_branch
          %494 = sbr.rel (%p492) target = $region92
        $region91: #{tpu_custom_call.1} parent=63 // pred_region
          %495 = dma.done [#allocation12], 2048
        $region92: #{tpu_custom_call.1} parent=63 // pred_fallthru
          _
        %s496 = sand.u32 %s41, 1
        %s497 = scalar_lea.sflag [#allocation3], %s496
        %s498 = sand.u32 %s41, 1
        %s499 = smul.addr %s498, 16
        %s500 = scalar_lea.vmem [#allocation2], %s499
        %p501 = pneg %p54
        %p502 = pneg %p51
        %s503 = sand.u32 %s33, 1
        %s504 = scalar_lea.sflag [#allocation6], %s503
        %s505 = sand.u32 %s67, 1
        %s506 = smul.addr %s505, 16
        %s507 = scalar_lea.vmem [#allocation5], %s506
        %p508 = pneg %p80
        %p509 = pneg %p77
        %s510 = sand.u32 %s33, 1
        %s511 = scalar_lea.sflag [#allocation6], %s510
        %s512 = sand.u32 %s93, 1
        %s513 = smul.addr %s512, 16
        %s514 = scalar_lea.vmem [#allocation7], %s513
        %p515 = pneg %p106
        %p516 = pneg %p103
        %p517 = pneg %p127
        %p518 = pneg %p124
        %p519 = pneg %p148
        %p520 = pneg %p145
        %p521 = pneg %p169
        %p522 = pneg %p166
        %p523 = pneg %p190
        %p524 = pneg %p187
        %p525 = pneg %p211
        %p526 = pneg %p208
        %p527 = pneg %p232
        %p528 = pneg %p229
        %p529 = pneg %p253
        %p530 = pneg %p250
        %p531 = pneg %p274
        %p532 = pneg %p271
        %p533 = pneg %p300
        %p534 = pneg %p297
        %s535 = sand.u32 %s287, 1
        %s536 = scalar_lea.sflag [#allocation4], %s535
        %s537 = sand.u32 %s287, 1
        %s538 = smul.addr %s537, 16
        %s539 = scalar_lea.vmem [#allocation14], %s538
        %v540 = vld [vmem:[%s457] sm:$0xff]
        %v541 = vld [vmem:[%s457 + $0x8] sm:$0xff]
        %v542 = vld [vmem:[%s466] sm:$0xff]
        %v543 = vld [vmem:[%s466 + $0x8] sm:$0xff]
        %v544 = vld [vmem:[%s475] sm:$0xff]
        %v545 = vld [vmem:[%s475 + $0x8] sm:$0xff]
        %v546 = vld [vmem:[#allocation8] sm:$0xff]
        %v547 = vld [vmem:[#allocation8 + $0x8] sm:$0xff]
        %v548 = vld [vmem:[#allocation8 + $0x10] sm:$0xff]
        %v549 = vld [vmem:[#allocation8 + $0x18] sm:$0xff]
        %v550 = vld [vmem:[#allocation8 + $0x20] sm:$0xff]
        %v551 = vld [vmem:[#allocation8 + $0x28] sm:$0xff]
        %v552 = vld [vmem:[#allocation8 + $0x30] sm:$0xff]
        %v553 = vld [vmem:[#allocation8 + $0x38] sm:$0xff]
        %v554 = vld [vmem:[#allocation8 + $0x40] sm:$0xff]
        %v555 = vld [vmem:[#allocation8 + $0x48] sm:$0xff]
        %v556 = vld [vmem:[#allocation8 + $0x50] sm:$0xff]
        %v557 = vld [vmem:[#allocation8 + $0x58] sm:$0xff]
        %v558 = vld [vmem:[#allocation8 + $0x60] sm:$0xff]
        %v559 = vld [vmem:[#allocation8 + $0x68] sm:$0xff]
        %v560 = vld [vmem:[#allocation8 + $0x70] sm:$0xff]
        %v561 = vld [vmem:[#allocation8 + $0x78] sm:$0xff]
        %v562 = vld [vmem:[#allocation10] sm:$0xff]
        %v563 = vld [vmem:[#allocation10 + $0x8] sm:$0xff]
        %v564 = vld [vmem:[#allocation10 + $0x10] sm:$0xff]
        %v565 = vld [vmem:[#allocation10 + $0x18] sm:$0xff]
        %v566 = vld [vmem:[#allocation10 + $0x20] sm:$0xff]
        %v567 = vld [vmem:[#allocation10 + $0x28] sm:$0xff]
        %v568 = vld [vmem:[#allocation10 + $0x30] sm:$0xff]
        %v569 = vld [vmem:[#allocation10 + $0x38] sm:$0xff]
        %v570 = vld [vmem:[#allocation10 + $0x40] sm:$0xff]
        %v571 = vld [vmem:[#allocation10 + $0x48] sm:$0xff]
        %v572 = vld [vmem:[#allocation10 + $0x50] sm:$0xff]
        %v573 = vld [vmem:[#allocation10 + $0x58] sm:$0xff]
        %v574 = vld [vmem:[#allocation10 + $0x60] sm:$0xff]
        %v575 = vld [vmem:[#allocation10 + $0x68] sm:$0xff]
        %v576 = vld [vmem:[#allocation10 + $0x70] sm:$0xff]
        %v577 = vld [vmem:[#allocation10 + $0x78] sm:$0xff]
        %v578 = vld [vmem:[#allocation11] sm:$0xff]
        %v579 = vld [vmem:[#allocation11 + $0x8] sm:$0xff]
        %v580 = vld [vmem:[#allocation11 + $0x10] sm:$0xff]
        %v581 = vld [vmem:[#allocation11 + $0x18] sm:$0xff]
        %v582 = vld [vmem:[#allocation11 + $0x20] sm:$0xff]
        %v583 = vld [vmem:[#allocation11 + $0x28] sm:$0xff]
        %v584 = vld [vmem:[#allocation11 + $0x30] sm:$0xff]
        %v585 = vld [vmem:[#allocation11 + $0x38] sm:$0xff]
        %v586 = vld [vmem:[#allocation11 + $0x40] sm:$0xff]
        %v587 = vld [vmem:[#allocation11 + $0x48] sm:$0xff]
        %v588 = vld [vmem:[#allocation11 + $0x50] sm:$0xff]
        %v589 = vld [vmem:[#allocation11 + $0x58] sm:$0xff]
        %v590 = vld [vmem:[#allocation11 + $0x60] sm:$0xff]
        %v591 = vld [vmem:[#allocation11 + $0x68] sm:$0xff]
        %v592 = vld [vmem:[#allocation11 + $0x70] sm:$0xff]
        %v593 = vld [vmem:[#allocation11 + $0x78] sm:$0xff]
        %v594 = vld [vmem:[#allocation13] sm:$0xff]
        %v595 = vld [vmem:[#allocation13 + $0x8] sm:$0xff]
        %v596 = vld [vmem:[#allocation13 + $0x10] sm:$0xff]
        %v597 = vld [vmem:[#allocation13 + $0x18] sm:$0xff]
        %v598 = vld [vmem:[#allocation13 + $0x20] sm:$0xff]
        %v599 = vld [vmem:[#allocation13 + $0x28] sm:$0xff]
        %v600 = vld [vmem:[#allocation13 + $0x30] sm:$0xff]
        %v601 = vld [vmem:[#allocation13 + $0x38] sm:$0xff]
        %v602 = vld [vmem:[#allocation13 + $0x40] sm:$0xff]
        %v603 = vld [vmem:[#allocation13 + $0x48] sm:$0xff]
        %v604 = vld [vmem:[#allocation13 + $0x50] sm:$0xff]
        %v605 = vld [vmem:[#allocation13 + $0x58] sm:$0xff]
        %v606 = vld [vmem:[#allocation13 + $0x60] sm:$0xff]
        %v607 = vld [vmem:[#allocation13 + $0x68] sm:$0xff]
        %v608 = vld [vmem:[#allocation13 + $0x70] sm:$0xff]
        %v609 = vld [vmem:[#allocation13 + $0x78] sm:$0xff]
        %v610 = vld [vmem:[%s7] sm:$0x1]
        %v612 = vlaneseq
        %v613 = vshrl.u32 %v612, 7
        %v614 = vsub.s32 0, %v613
        %v615 = vrot.slane %v610, %v614
        %617 = vmatprep.subr.mxu0 0.0
        %618 = vmatpush1.msra.mxu0 %v546
        %619 = vmatprep.subr.mxu0 0.0
        %620 = vmatpush1.msra.mxu0 %v547
        %621 = vmatprep.subr.mxu0 0.0
        %622 = vmatpush1.msra.mxu0 %v548
        %623 = vmatprep.subr.mxu0 0.0
        %624 = vmatpush1.msra.mxu0 %v549
        %625 = vmatprep.subr.mxu0 0.0
        %626 = vmatpush1.msra.mxu0 %v550
        %627 = vmatprep.subr.mxu0 0.0
        %628 = vmatpush1.msra.mxu0 %v551
        %629 = vmatprep.subr.mxu0 0.0
        %630 = vmatpush1.msra.mxu0 %v552
        %631 = vmatprep.subr.mxu0 0.0
        %632 = vmatpush1.msra.mxu0 %v553
        %633 = vmatprep.subr.mxu0 0.0
        %634 = vmatpush1.msra.mxu0 %v554
        %635 = vmatprep.subr.mxu0 0.0
        %636 = vmatpush1.msra.mxu0 %v555
        %637 = vmatprep.subr.mxu0 0.0
        %638 = vmatpush1.msra.mxu0 %v556
        %639 = vmatprep.subr.mxu0 0.0
        %640 = vmatpush1.msra.mxu0 %v557
        %641 = vmatprep.subr.mxu0 0.0
        %642 = vmatpush1.msra.mxu0 %v558
        %643 = vmatprep.subr.mxu0 0.0
        %644 = vmatpush1.msra.mxu0 %v559
        %645 = vmatprep.subr.mxu0 0.0
        %646 = vmatpush1.msra.mxu0 %v560
        %647 = vmatprep.subr.mxu0 0.0
        %648 = vmatpush1.msra.mxu0 %v561
        %649 = vmatprep.subr.mxu0 0.0
        %650 = vmatpush1.msra.mxu0 0.0
        %651 = vmatprep.subr.mxu0 0.0
        %652 = vmatpush1.msra.mxu0 0.0
        %653 = vmatprep.subr.mxu0 0.0
        %654 = vmatpush1.msra.mxu0 0.0
        %655 = vmatprep.subr.mxu0 0.0
        %656 = vmatpush1.msra.mxu0 0.0
        %657 = vmatprep.subr.mxu0 0.0
        %658 = vmatpush1.msra.mxu0 0.0
        %659 = vmatprep.subr.mxu0 0.0
        %660 = vmatpush1.msra.mxu0 0.0
        %661 = vmatprep.subr.mxu0 0.0
        %662 = vmatpush1.msra.mxu0 0.0
        %663 = vmatprep.subr.mxu0 0.0
        %664 = vmatpush1.msra.mxu0 0.0
        %665 = vmatprep.subr.mxu0 0.0
        %666 = vmatpush1.msra.mxu0 0.0
        %667 = vmatprep.subr.mxu0 0.0
        %668 = vmatpush1.msra.mxu0 0.0
        %669 = vmatprep.subr.mxu0 0.0
        %670 = vmatpush1.msra.mxu0 0.0
        %671 = vmatprep.subr.mxu0 0.0
        %672 = vmatpush1.msra.mxu0 0.0
        %673 = vmatprep.subr.mxu0 0.0
        %674 = vmatpush1.msra.mxu0 0.0
        %675 = vmatprep.subr.mxu0 0.0
        %676 = vmatpush1.msra.mxu0 0.0
        %677 = vmatprep.subr.mxu0 0.0
        %678 = vmatpush1.msra.mxu0 0.0
        %679 = vmatprep.subr.mxu0 0.0
        %680 = vmatpush1.msra.mxu0 0.0
        %681 = vmatprep.mubr.f32.mxu0 0.0
        %682 = vmatmul.mubr.f32.gmra.mrb[0].mxu0 %v540
        %v683 = vpop.f32.mrb[0].mxu0
        %v684 = vadd.f32 %v615, %v683
        %v685 = vpop.f32.mrb[0].mxu0
        %686 = vmatprep.mubr.f32.mxu0 0.0
        %687 = vmatmul.mubr.f32.gmra.mrb[0].mxu0 %v541
        %v688 = vpop.f32.mrb[0].mxu0
        %v689 = vadd.f32 %v615, %v688
        %v690 = vpop.f32.mrb[0].mxu0
        %691 = vdwg.mxu0
        %v692 = vld [vmem:[%s8] sm:$0x1]
        %v694 = vlaneseq
        %v695 = vshrl.u32 %v694, 7
        %v696 = vsub.s32 0, %v695
        %v697 = vrot.slane %v692, %v696
        %699 = vmatprep.subr.mxu0 0.0
        %700 = vmatpush1.msra.mxu0 %v562
        %701 = vmatprep.subr.mxu0 0.0
        %702 = vmatpush1.msra.mxu0 %v563
        %703 = vmatprep.subr.mxu0 0.0
        %704 = vmatpush1.msra.mxu0 %v564
        %705 = vmatprep.subr.mxu0 0.0
        %706 = vmatpush1.msra.mxu0 %v565
        %707 = vmatprep.subr.mxu0 0.0
        %708 = vmatpush1.msra.mxu0 %v566
        %709 = vmatprep.subr.mxu0 0.0
        %710 = vmatpush1.msra.mxu0 %v567
        %711 = vmatprep.subr.mxu0 0.0
        %712 = vmatpush1.msra.mxu0 %v568
        %713 = vmatprep.subr.mxu0 0.0
        %714 = vmatpush1.msra.mxu0 %v569
        %715 = vmatprep.subr.mxu0 0.0
        %716 = vmatpush1.msra.mxu0 %v570
        %717 = vmatprep.subr.mxu0 0.0
        %718 = vmatpush1.msra.mxu0 %v571
        %719 = vmatprep.subr.mxu0 0.0
        %720 = vmatpush1.msra.mxu0 %v572
        %721 = vmatprep.subr.mxu0 0.0
        %722 = vmatpush1.msra.mxu0 %v573
        %723 = vmatprep.subr.mxu0 0.0
        %724 = vmatpush1.msra.mxu0 %v574
        %725 = vmatprep.subr.mxu0 0.0
        %726 = vmatpush1.msra.mxu0 %v575
        %727 = vmatprep.subr.mxu0 0.0
        %728 = vmatpush1.msra.mxu0 %v576
        %729 = vmatprep.subr.mxu0 0.0
        %730 = vmatpush1.msra.mxu0 %v577
        %731 = vmatprep.subr.mxu0 0.0
        %732 = vmatpush1.msra.mxu0 0.0
        %733 = vmatprep.subr.mxu0 0.0
        %734 = vmatpush1.msra.mxu0 0.0
        %735 = vmatprep.subr.mxu0 0.0
        %736 = vmatpush1.msra.mxu0 0.0
        %737 = vmatprep.subr.mxu0 0.0
        %738 = vmatpush1.msra.mxu0 0.0
        %739 = vmatprep.subr.mxu0 0.0
        %740 = vmatpush1.msra.mxu0 0.0
        %741 = vmatprep.subr.mxu0 0.0
        %742 = vmatpush1.msra.mxu0 0.0
        %743 = vmatprep.subr.mxu0 0.0
        %744 = vmatpush1.msra.mxu0 0.0
        %745 = vmatprep.subr.mxu0 0.0
        %746 = vmatpush1.msra.mxu0 0.0
        %747 = vmatprep.subr.mxu0 0.0
        %748 = vmatpush1.msra.mxu0 0.0
        %749 = vmatprep.subr.mxu0 0.0
        %750 = vmatpush1.msra.mxu0 0.0
        %751 = vmatprep.subr.mxu0 0.0
        %752 = vmatpush1.msra.mxu0 0.0
        %753 = vmatprep.subr.mxu0 0.0
        %754 = vmatpush1.msra.mxu0 0.0
        %755 = vmatprep.subr.mxu0 0.0
        %756 = vmatpush1.msra.mxu0 0.0
        %757 = vmatprep.subr.mxu0 0.0
        %758 = vmatpush1.msra.mxu0 0.0
        %759 = vmatprep.subr.mxu0 0.0
        %760 = vmatpush1.msra.mxu0 0.0
        %761 = vmatprep.subr.mxu0 0.0
        %762 = vmatpush1.msra.mxu0 0.0
        %763 = vmatprep.mubr.f32.mxu0 0.0
        %764 = vmatmul.mubr.f32.gmra.mrb[0].mxu0 %v542
        %v765 = vpop.f32.mrb[0].mxu0
        %v766 = vadd.f32 %v697, %v765
        %v767 = vpop.f32.mrb[0].mxu0
        %768 = vmatprep.mubr.f32.mxu0 0.0
        %769 = vmatmul.mubr.f32.gmra.mrb[0].mxu0 %v543
        %v770 = vpop.f32.mrb[0].mxu0
        %v771 = vadd.f32 %v697, %v770
        %v772 = vpop.f32.mrb[0].mxu0
        %773 = vdwg.mxu0
        %v774 = vld [vmem:[%s9] sm:$0x1]
        %v776 = vlaneseq
        %v777 = vshrl.u32 %v776, 7
        %v778 = vsub.s32 0, %v777
        %v779 = vrot.slane %v774, %v778
        %781 = vmatprep.subr.mxu0 0.0
        %782 = vmatpush1.msra.mxu0 %v578
        %783 = vmatprep.subr.mxu0 0.0
        %784 = vmatpush1.msra.mxu0 %v579
        %785 = vmatprep.subr.mxu0 0.0
        %786 = vmatpush1.msra.mxu0 %v580
        %787 = vmatprep.subr.mxu0 0.0
        %788 = vmatpush1.msra.mxu0 %v581
        %789 = vmatprep.subr.mxu0 0.0
        %790 = vmatpush1.msra.mxu0 %v582
        %791 = vmatprep.subr.mxu0 0.0
        %792 = vmatpush1.msra.mxu0 %v583
        %793 = vmatprep.subr.mxu0 0.0
        %794 = vmatpush1.msra.mxu0 %v584
        %795 = vmatprep.subr.mxu0 0.0
        %796 = vmatpush1.msra.mxu0 %v585
        %797 = vmatprep.subr.mxu0 0.0
        %798 = vmatpush1.msra.mxu0 %v586
        %799 = vmatprep.subr.mxu0 0.0
        %800 = vmatpush1.msra.mxu0 %v587
        %801 = vmatprep.subr.mxu0 0.0
        %802 = vmatpush1.msra.mxu0 %v588
        %803 = vmatprep.subr.mxu0 0.0
        %804 = vmatpush1.msra.mxu0 %v589
        %805 = vmatprep.subr.mxu0 0.0
        %806 = vmatpush1.msra.mxu0 %v590
        %807 = vmatprep.subr.mxu0 0.0
        %808 = vmatpush1.msra.mxu0 %v591
        %809 = vmatprep.subr.mxu0 0.0
        %810 = vmatpush1.msra.mxu0 %v592
        %811 = vmatprep.subr.mxu0 0.0
        %812 = vmatpush1.msra.mxu0 %v593
        %813 = vmatprep.subr.mxu0 0.0
        %814 = vmatpush1.msra.mxu0 0.0
        %815 = vmatprep.subr.mxu0 0.0
        %816 = vmatpush1.msra.mxu0 0.0
        %817 = vmatprep.subr.mxu0 0.0
        %818 = vmatpush1.msra.mxu0 0.0
        %819 = vmatprep.subr.mxu0 0.0
        %820 = vmatpush1.msra.mxu0 0.0
        %821 = vmatprep.subr.mxu0 0.0
        %822 = vmatpush1.msra.mxu0 0.0
        %823 = vmatprep.subr.mxu0 0.0
        %824 = vmatpush1.msra.mxu0 0.0
        %825 = vmatprep.subr.mxu0 0.0
        %826 = vmatpush1.msra.mxu0 0.0
        %827 = vmatprep.subr.mxu0 0.0
        %828 = vmatpush1.msra.mxu0 0.0
        %829 = vmatprep.subr.mxu0 0.0
        %830 = vmatpush1.msra.mxu0 0.0
        %831 = vmatprep.subr.mxu0 0.0
        %832 = vmatpush1.msra.mxu0 0.0
        %833 = vmatprep.subr.mxu0 0.0
        %834 = vmatpush1.msra.mxu0 0.0
        %835 = vmatprep.subr.mxu0 0.0
        %836 = vmatpush1.msra.mxu0 0.0
        %837 = vmatprep.subr.mxu0 0.0
        %838 = vmatpush1.msra.mxu0 0.0
        %839 = vmatprep.subr.mxu0 0.0
        %840 = vmatpush1.msra.mxu0 0.0
        %841 = vmatprep.subr.mxu0 0.0
        %842 = vmatpush1.msra.mxu0 0.0
        %843 = vmatprep.subr.mxu0 0.0
        %844 = vmatpush1.msra.mxu0 0.0
        %845 = vmatprep.mubr.f32.mxu0 0.0
        %846 = vmatmul.mubr.f32.gmra.mrb[0].mxu0 %v544
        %v847 = vpop.f32.mrb[0].mxu0
        %v848 = vadd.f32 %v779, %v847
        %v849 = vpop.f32.mrb[0].mxu0
        %850 = vmatprep.mubr.f32.mxu0 0.0
        %851 = vmatmul.mubr.f32.gmra.mrb[0].mxu0 %v545
        %v852 = vpop.f32.mrb[0].mxu0
        %v853 = vadd.f32 %v779, %v852
        %v854 = vpop.f32.mrb[0].mxu0
        %855 = vdwg.mxu0
        %vm856 = vcmask 261120
        %v858 = vsel %vm856, %v684, 0
        %v861 = vsel %vm856, %v689, 0
        %v864 = vsel %vm856, %v766, 0
        %v867 = vsel %vm856, %v771, 0
        %869 = vmatprep.subr.mxu0 0.0
        %870 = vmatpush1.xpose.msra.mxu0 %v864
        %871 = vmatprep.subr.mxu0 0.0
        %872 = vmatpush1.xpose.msra.mxu0 %v867
        %873 = vmatprep.subr.mxu0 0.0
        %874 = vmatpush1.xpose.msra.mxu0 0.0
        %875 = vmatprep.subr.mxu0 0.0
        %876 = vmatpush1.xpose.msra.mxu0 0.0
        %877 = vmatprep.subr.mxu0 0.0
        %878 = vmatpush1.xpose.msra.mxu0 0.0
        %879 = vmatprep.subr.mxu0 0.0
        %880 = vmatpush1.xpose.msra.mxu0 0.0
        %881 = vmatprep.subr.mxu0 0.0
        %882 = vmatpush1.xpose.msra.mxu0 0.0
        %883 = vmatprep.subr.mxu0 0.0
        %884 = vmatpush1.xpose.msra.mxu0 0.0
        %885 = vmatprep.subr.mxu0 0.0
        %886 = vmatpush1.xpose.msra.mxu0 0.0
        %887 = vmatprep.subr.mxu0 0.0
        %888 = vmatpush1.xpose.msra.mxu0 0.0
        %889 = vmatprep.subr.mxu0 0.0
        %890 = vmatpush1.xpose.msra.mxu0 0.0
        %891 = vmatprep.subr.mxu0 0.0
        %892 = vmatpush1.xpose.msra.mxu0 0.0
        %893 = vmatprep.subr.mxu0 0.0
        %894 = vmatpush1.xpose.msra.mxu0 0.0
        %895 = vmatprep.subr.mxu0 0.0
        %896 = vmatpush1.xpose.msra.mxu0 0.0
        %897 = vmatprep.subr.mxu0 0.0
        %898 = vmatpush1.xpose.msra.mxu0 0.0
        %899 = vmatprep.subr.mxu0 0.0
        %900 = vmatpush1.xpose.msra.mxu0 0.0
        %901 = vmatprep.subr.mxu0 0.0
        %902 = vmatpush1.xpose.msra.mxu0 0.0
        %903 = vmatprep.subr.mxu0 0.0
        %904 = vmatpush1.xpose.msra.mxu0 0.0
        %905 = vmatprep.subr.mxu0 0.0
        %906 = vmatpush1.xpose.msra.mxu0 0.0
        %907 = vmatprep.subr.mxu0 0.0
        %908 = vmatpush1.xpose.msra.mxu0 0.0
        %909 = vmatprep.subr.mxu0 0.0
        %910 = vmatpush1.xpose.msra.mxu0 0.0
        %911 = vmatprep.subr.mxu0 0.0
        %912 = vmatpush1.xpose.msra.mxu0 0.0
        %913 = vmatprep.subr.mxu0 0.0
        %914 = vmatpush1.xpose.msra.mxu0 0.0
        %915 = vmatprep.subr.mxu0 0.0
        %916 = vmatpush1.xpose.msra.mxu0 0.0
        %917 = vmatprep.subr.mxu0 0.0
        %918 = vmatpush1.xpose.msra.mxu0 0.0
        %919 = vmatprep.subr.mxu0 0.0
        %920 = vmatpush1.xpose.msra.mxu0 0.0
        %921 = vmatprep.subr.mxu0 0.0
        %922 = vmatpush1.xpose.msra.mxu0 0.0
        %923 = vmatprep.subr.mxu0 0.0
        %924 = vmatpush1.xpose.msra.mxu0 0.0
        %925 = vmatprep.subr.mxu0 0.0
        %926 = vmatpush1.xpose.msra.mxu0 0.0
        %927 = vmatprep.subr.mxu0 0.0
        %928 = vmatpush1.xpose.msra.mxu0 0.0
        %929 = vmatprep.subr.mxu0 0.0
        %930 = vmatpush1.xpose.msra.mxu0 0.0
        %931 = vmatprep.subr.mxu0 0.0
        %932 = vmatpush1.xpose.msra.mxu0 0.0
        %933 = vmatprep.mubr.f32.mxu0 0.0
        %934 = vmatmul.mubr.f32.gmra.mrb[0].mxu0 %v858
        %v935 = vpop.f32.mrb[0].mxu0
        %v936 = vadd.f32 0.0, %v935
        %v937 = vpop.f32.mrb[0].mxu0
        %938 = vmatprep.mubr.f32.mxu0 0.0
        %939 = vmatmul.mubr.f32.gmra.mrb[0].mxu0 %v861
        %v940 = vpop.f32.mrb[0].mxu0
        %v941 = vadd.f32 0.0, %v940
        %v942 = vpop.f32.mrb[0].mxu0
        %943 = vdwg.mxu0
        %v944 = vmul.f32 %v936, 0.17677669
        %v945 = vmul.f32 %v941, 0.17677669
        %vm946 = vcmask 130048
        %v947 = vsel %vm946, %v944, -inf
        %948 = vmax.xlane.f32.xlu0 %v947
        %v949 = vpop.xlane.xlu0 %948
        %v950 = vsel %vm946, %v945, -inf
        %951 = vmax.xlane.f32.xlu0 %v950
        %v952 = vpop.xlane.xlu0 %951
        %v953 = vsub.f32 %v944, %v949
        %v954 = vsub.f32 %v945, %v952
        %v955 = vmul.f32 %v953, 1.442695
        %v956 = vpow.pop %v955
        %v957 = vmul.f32 %v954, 1.442695
        %v958 = vpow.pop %v957
        %v959 = vsel %vm946, %v956, 0.0
        %960 = vadd.xlane.f32.xlu0 %v959
        %v961 = vpop.xlane.xlu0 %960
        %v962 = vsel %vm946, %v958, 0.0
        %963 = vadd.xlane.f32.xlu0 %v962
        %v964 = vpop.xlane.xlu0 %963
        %v965 = vrcp.pop %v961
        %v966 = vmul.f32 %v956, %v965
        %v967 = vrcp.pop %v964
        %v968 = vmul.f32 %v958, %v967
        %v970 = vsel %vm946, %v966, 0
        %v973 = vsel %vm946, %v968, 0
        %975 = vmatprep.subr.mxu0 0.0
        %976 = vmatpush1.msra.mxu0 %v848
        %977 = vmatprep.subr.mxu0 0.0
        %978 = vmatpush1.msra.mxu0 %v853
        %979 = vmatprep.subr.mxu0 0.0
        %980 = vmatpush1.msra.mxu0 0.0
        %981 = vmatprep.subr.mxu0 0.0
        %982 = vmatpush1.msra.mxu0 0.0
        %983 = vmatprep.subr.mxu0 0.0
        %984 = vmatpush1.msra.mxu0 0.0
        %985 = vmatprep.subr.mxu0 0.0
        %986 = vmatpush1.msra.mxu0 0.0
        %987 = vmatprep.subr.mxu0 0.0
        %988 = vmatpush1.msra.mxu0 0.0
        %989 = vmatprep.subr.mxu0 0.0
        %990 = vmatpush1.msra.mxu0 0.0
        %991 = vmatprep.subr.mxu0 0.0
        %992 = vmatpush1.msra.mxu0 0.0
        %993 = vmatprep.subr.mxu0 0.0
        %994 = vmatpush1.msra.mxu0 0.0
        %995 = vmatprep.subr.mxu0 0.0
        %996 = vmatpush1.msra.mxu0 0.0
        %997 = vmatprep.subr.mxu0 0.0
        %998 = vmatpush1.msra.mxu0 0.0
        %999 = vmatprep.subr.mxu0 0.0
        %1000 = vmatpush1.msra.mxu0 0.0
        %1001 = vmatprep.subr.mxu0 0.0
        %1002 = vmatpush1.msra.mxu0 0.0
        %1003 = vmatprep.subr.mxu0 0.0
        %1004 = vmatpush1.msra.mxu0 0.0
        %1005 = vmatprep.subr.mxu0 0.0
        %1006 = vmatpush1.msra.mxu0 0.0
        %1007 = vmatprep.subr.mxu0 0.0
        %1008 = vmatpush1.msra.mxu0 0.0
        %1009 = vmatprep.subr.mxu0 0.0
        %1010 = vmatpush1.msra.mxu0 0.0
        %1011 = vmatprep.subr.mxu0 0.0
        %1012 = vmatpush1.msra.mxu0 0.0
        %1013 = vmatprep.subr.mxu0 0.0
        %1014 = vmatpush1.msra.mxu0 0.0
        %1015 = vmatprep.subr.mxu0 0.0
        %1016 = vmatpush1.msra.mxu0 0.0
        %1017 = vmatprep.subr.mxu0 0.0
        %1018 = vmatpush1.msra.mxu0 0.0
        %1019 = vmatprep.subr.mxu0 0.0
        %1020 = vmatpush1.msra.mxu0 0.0
        %1021 = vmatprep.subr.mxu0 0.0
        %1022 = vmatpush1.msra.mxu0 0.0
        %1023 = vmatprep.subr.mxu0 0.0
        %1024 = vmatpush1.msra.mxu0 0.0
        %1025 = vmatprep.subr.mxu0 0.0
        %1026 = vmatpush1.msra.mxu0 0.0
        %1027 = vmatprep.subr.mxu0 0.0
        %1028 = vmatpush1.msra.mxu0 0.0
        %1029 = vmatprep.subr.mxu0 0.0
        %1030 = vmatpush1.msra.mxu0 0.0
        %1031 = vmatprep.subr.mxu0 0.0
        %1032 = vmatpush1.msra.mxu0 0.0
        %1033 = vmatprep.subr.mxu0 0.0
        %1034 = vmatpush1.msra.mxu0 0.0
        %1035 = vmatprep.subr.mxu0 0.0
        %1036 = vmatpush1.msra.mxu0 0.0
        %1037 = vmatprep.subr.mxu0 0.0
        %1038 = vmatpush1.msra.mxu0 0.0
        %1039 = vmatprep.mubr.f32.mxu0 0.0
        %1040 = vmatmul.mubr.f32.gmra.mrb[0].mxu0 %v970
        %v1041 = vpop.f32.mrb[0].mxu0
        %v1042 = vadd.f32 0.0, %v1041
        %v1043 = vpop.f32.mrb[0].mxu0
        %1044 = vmatprep.mubr.f32.mxu0 0.0
        %1045 = vmatmul.mubr.f32.gmra.mrb[0].mxu0 %v973
        %v1046 = vpop.f32.mrb[0].mxu0
        %v1047 = vadd.f32 0.0, %v1046
        %v1048 = vpop.f32.mrb[0].mxu0
        %1049 = vdwg.mxu0
        %1050 = vrot.lane.b32.xlu0 %v684, 96
        %v1051 = vpop.permute.xlu0 %1050
        %1052 = vrot.lane.b32.xlu0 %v689, 96
        %v1053 = vpop.permute.xlu0 %1052
        %1054 = vrot.lane.b32.xlu0 %v766, 96
        %v1055 = vpop.permute.xlu0 %1054
        %1056 = vrot.lane.b32.xlu0 %v771, 96
        %v1057 = vpop.permute.xlu0 %1056
        %v1058 = vsel %vm856, %v1051, 0
        %v1060 = vsel %vm856, %v1053, 0
        %v1062 = vsel %vm856, %v1055, 0
        %v1064 = vsel %vm856, %v1057, 0
        %1066 = vmatprep.subr.mxu0 0.0
        %1067 = vmatpush1.xpose.msra.mxu0 %v1062
        %1068 = vmatprep.subr.mxu0 0.0
        %1069 = vmatpush1.xpose.msra.mxu0 %v1064
        %1070 = vmatprep.subr.mxu0 0.0
        %1071 = vmatpush1.xpose.msra.mxu0 0.0
        %1072 = vmatprep.subr.mxu0 0.0
        %1073 = vmatpush1.xpose.msra.mxu0 0.0
        %1074 = vmatprep.subr.mxu0 0.0
        %1075 = vmatpush1.xpose.msra.mxu0 0.0
        %1076 = vmatprep.subr.mxu0 0.0
        %1077 = vmatpush1.xpose.msra.mxu0 0.0
        %1078 = vmatprep.subr.mxu0 0.0
        %1079 = vmatpush1.xpose.msra.mxu0 0.0
        %1080 = vmatprep.subr.mxu0 0.0
        %1081 = vmatpush1.xpose.msra.mxu0 0.0
        %1082 = vmatprep.subr.mxu0 0.0
        %1083 = vmatpush1.xpose.msra.mxu0 0.0
        %1084 = vmatprep.subr.mxu0 0.0
        %1085 = vmatpush1.xpose.msra.mxu0 0.0
        %1086 = vmatprep.subr.mxu0 0.0
        %1087 = vmatpush1.xpose.msra.mxu0 0.0
        %1088 = vmatprep.subr.mxu0 0.0
        %1089 = vmatpush1.xpose.msra.mxu0 0.0
        %1090 = vmatprep.subr.mxu0 0.0
        %1091 = vmatpush1.xpose.msra.mxu0 0.0
        %1092 = vmatprep.subr.mxu0 0.0
        %1093 = vmatpush1.xpose.msra.mxu0 0.0
        %1094 = vmatprep.subr.mxu0 0.0
        %1095 = vmatpush1.xpose.msra.mxu0 0.0
        %1096 = vmatprep.subr.mxu0 0.0
        %1097 = vmatpush1.xpose.msra.mxu0 0.0
        %1098 = vmatprep.subr.mxu0 0.0
        %1099 = vmatpush1.xpose.msra.mxu0 0.0
        %1100 = vmatprep.subr.mxu0 0.0
        %1101 = vmatpush1.xpose.msra.mxu0 0.0
        %1102 = vmatprep.subr.mxu0 0.0
        %1103 = vmatpush1.xpose.msra.mxu0 0.0
        %1104 = vmatprep.subr.mxu0 0.0
        %1105 = vmatpush1.xpose.msra.mxu0 0.0
        %1106 = vmatprep.subr.mxu0 0.0
        %1107 = vmatpush1.xpose.msra.mxu0 0.0
        %1108 = vmatprep.subr.mxu0 0.0
        %1109 = vmatpush1.xpose.msra.mxu0 0.0
        %1110 = vmatprep.subr.mxu0 0.0
        %1111 = vmatpush1.xpose.msra.mxu0 0.0
        %1112 = vmatprep.subr.mxu0 0.0
        %1113 = vmatpush1.xpose.msra.mxu0 0.0
        %1114 = vmatprep.subr.mxu0 0.0
        %1115 = vmatpush1.xpose.msra.mxu0 0.0
        %1116 = vmatprep.subr.mxu0 0.0
        %1117 = vmatpush1.xpose.msra.mxu0 0.0
        %1118 = vmatprep.subr.mxu0 0.0
        %1119 = vmatpush1.xpose.msra.mxu0 0.0
        %1120 = vmatprep.subr.mxu0 0.0
        %1121 = vmatpush1.xpose.msra.mxu0 0.0
        %1122 = vmatprep.subr.mxu0 0.0
        %1123 = vmatpush1.xpose.msra.mxu0 0.0
        %1124 = vmatprep.subr.mxu0 0.0
        %1125 = vmatpush1.xpose.msra.mxu0 0.0
        %1126 = vmatprep.subr.mxu0 0.0
        %1127 = vmatpush1.xpose.msra.mxu0 0.0
        %1128 = vmatprep.subr.mxu0 0.0
        %1129 = vmatpush1.xpose.msra.mxu0 0.0
        %1130 = vmatprep.mubr.f32.mxu0 0.0
        %1131 = vmatmul.mubr.f32.gmra.mrb[0].mxu0 %v1058
        %v1132 = vpop.f32.mrb[0].mxu0
        %v1133 = vadd.f32 0.0, %v1132
        %v1134 = vpop.f32.mrb[0].mxu0
        %1135 = vmatprep.mubr.f32.mxu0 0.0
        %1136 = vmatmul.mubr.f32.gmra.mrb[0].mxu0 %v1060
        %v1137 = vpop.f32.mrb[0].mxu0
        %v1138 = vadd.f32 0.0, %v1137
        %v1139 = vpop.f32.mrb[0].mxu0
        %1140 = vdwg.mxu0
        %v1141 = vmul.f32 %v1133, 0.17677669
        %v1142 = vmul.f32 %v1138, 0.17677669
        %v1143 = vsel %vm946, %v1141, -inf
        %1144 = vmax.xlane.f32.xlu0 %v1143
        %v1145 = vpop.xlane.xlu0 %1144
        %v1146 = vsel %vm946, %v1142, -inf
        %1147 = vmax.xlane.f32.xlu0 %v1146
        %v1148 = vpop.xlane.xlu0 %1147
        %v1149 = vsub.f32 %v1141, %v1145
        %v1150 = vsub.f32 %v1142, %v1148
        %v1151 = vmul.f32 %v1149, 1.442695
        %v1152 = vpow.pop %v1151
        %v1153 = vmul.f32 %v1150, 1.442695
        %v1154 = vpow.pop %v1153
        %v1155 = vsel %vm946, %v1152, 0.0
        %1156 = vadd.xlane.f32.xlu0 %v1155
        %v1157 = vpop.xlane.xlu0 %1156
        %v1158 = vsel %vm946, %v1154, 0.0
        %1159 = vadd.xlane.f32.xlu0 %v1158
        %v1160 = vpop.xlane.xlu0 %1159
        %v1161 = vrcp.pop %v1157
        %v1162 = vmul.f32 %v1152, %v1161
        %v1163 = vrcp.pop %v1160
        %v1164 = vmul.f32 %v1154, %v1163
        %1167 = vrot.lane.b32.xlu0 %v848, 96
        %v1168 = vpop.permute.xlu0 %1167
        %1169 = vrot.lane.b32.xlu0 %v853, 96
        %v1170 = vpop.permute.xlu0 %1169
        %v1174 = vsel %vm946, %v1162, 0
        %v1177 = vsel %vm946, %v1164, 0
        %1179 = vmatprep.subr.mxu0 0.0
        %1180 = vmatpush1.msra.mxu0 %v1168
        %1181 = vmatprep.subr.mxu0 0.0
        %1182 = vmatpush1.msra.mxu0 %v1170
        %1183 = vmatprep.subr.mxu0 0.0
        %1184 = vmatpush1.msra.mxu0 0.0
        %1185 = vmatprep.subr.mxu0 0.0
        %1186 = vmatpush1.msra.mxu0 0.0
        %1187 = vmatprep.subr.mxu0 0.0
        %1188 = vmatpush1.msra.mxu0 0.0
        %1189 = vmatprep.subr.mxu0 0.0
        %1190 = vmatpush1.msra.mxu0 0.0
        %1191 = vmatprep.subr.mxu0 0.0
        %1192 = vmatpush1.msra.mxu0 0.0
        %1193 = vmatprep.subr.mxu0 0.0
        %1194 = vmatpush1.msra.mxu0 0.0
        %1195 = vmatprep.subr.mxu0 0.0
        %1196 = vmatpush1.msra.mxu0 0.0
        %1197 = vmatprep.subr.mxu0 0.0
        %1198 = vmatpush1.msra.mxu0 0.0
        %1199 = vmatprep.subr.mxu0 0.0
        %1200 = vmatpush1.msra.mxu0 0.0
        %1201 = vmatprep.subr.mxu0 0.0
        %1202 = vmatpush1.msra.mxu0 0.0
        %1203 = vmatprep.subr.mxu0 0.0
        %1204 = vmatpush1.msra.mxu0 0.0
        %1205 = vmatprep.subr.mxu0 0.0
        %1206 = vmatpush1.msra.mxu0 0.0
        %1207 = vmatprep.subr.mxu0 0.0
        %1208 = vmatpush1.msra.mxu0 0.0
        %1209 = vmatprep.subr.mxu0 0.0
        %1210 = vmatpush1.msra.mxu0 0.0
        %1211 = vmatprep.subr.mxu0 0.0
        %1212 = vmatpush1.msra.mxu0 0.0
        %1213 = vmatprep.subr.mxu0 0.0
        %1214 = vmatpush1.msra.mxu0 0.0
        %1215 = vmatprep.subr.mxu0 0.0
        %1216 = vmatpush1.msra.mxu0 0.0
        %1217 = vmatprep.subr.mxu0 0.0
        %1218 = vmatpush1.msra.mxu0 0.0
        %1219 = vmatprep.subr.mxu0 0.0
        %1220 = vmatpush1.msra.mxu0 0.0
        %1221 = vmatprep.subr.mxu0 0.0
        %1222 = vmatpush1.msra.mxu0 0.0
        %1223 = vmatprep.subr.mxu0 0.0
        %1224 = vmatpush1.msra.mxu0 0.0
        %1225 = vmatprep.subr.mxu0 0.0
        %1226 = vmatpush1.msra.mxu0 0.0
        %1227 = vmatprep.subr.mxu0 0.0
        %1228 = vmatpush1.msra.mxu0 0.0
        %1229 = vmatprep.subr.mxu0 0.0
        %1230 = vmatpush1.msra.mxu0 0.0
        %1231 = vmatprep.subr.mxu0 0.0
        %1232 = vmatpush1.msra.mxu0 0.0
        %1233 = vmatprep.subr.mxu0 0.0
        %1234 = vmatpush1.msra.mxu0 0.0
        %1235 = vmatprep.subr.mxu0 0.0
        %1236 = vmatpush1.msra.mxu0 0.0
        %1237 = vmatprep.subr.mxu0 0.0
        %1238 = vmatpush1.msra.mxu0 0.0
        %1239 = vmatprep.subr.mxu0 0.0
        %1240 = vmatpush1.msra.mxu0 0.0
        %1241 = vmatprep.subr.mxu0 0.0
        %1242 = vmatpush1.msra.mxu0 0.0
        %1243 = vmatprep.mubr.f32.mxu0 0.0
        %1244 = vmatmul.mubr.f32.gmra.mrb[0].mxu0 %v1174
        %v1245 = vpop.f32.mrb[0].mxu0
        %v1246 = vadd.f32 0.0, %v1245
        %v1247 = vpop.f32.mrb[0].mxu0
        %1248 = vmatprep.mubr.f32.mxu0 0.0
        %1249 = vmatmul.mubr.f32.gmra.mrb[0].mxu0 %v1177
        %v1250 = vpop.f32.mrb[0].mxu0
        %v1251 = vadd.f32 0.0, %v1250
        %v1252 = vpop.f32.mrb[0].mxu0
        %1253 = vdwg.mxu0
        %1254 = vrot.lane.b32.xlu0 %v684, 64
        %v1255 = vpop.permute.xlu0 %1254
        %1256 = vrot.lane.b32.xlu0 %v689, 64
        %v1257 = vpop.permute.xlu0 %1256
        %1258 = vrot.lane.b32.xlu0 %v766, 64
        %v1259 = vpop.permute.xlu0 %1258
        %1260 = vrot.lane.b32.xlu0 %v771, 64
        %v1261 = vpop.permute.xlu0 %1260
        %v1262 = vsel %vm856, %v1255, 0
        %v1264 = vsel %vm856, %v1257, 0
        %v1266 = vsel %vm856, %v1259, 0
        %v1268 = vsel %vm856, %v1261, 0
        %1270 = vmatprep.subr.mxu0 0.0
        %1271 = vmatpush1.xpose.msra.mxu0 %v1266
        %1272 = vmatprep.subr.mxu0 0.0
        %1273 = vmatpush1.xpose.msra.mxu0 %v1268
        %1274 = vmatprep.subr.mxu0 0.0
        %1275 = vmatpush1.xpose.msra.mxu0 0.0
        %1276 = vmatprep.subr.mxu0 0.0
        %1277 = vmatpush1.xpose.msra.mxu0 0.0
        %1278 = vmatprep.subr.mxu0 0.0
        %1279 = vmatpush1.xpose.msra.mxu0 0.0
        %1280 = vmatprep.subr.mxu0 0.0
        %1281 = vmatpush1.xpose.msra.mxu0 0.0
        %1282 = vmatprep.subr.mxu0 0.0
        %1283 = vmatpush1.xpose.msra.mxu0 0.0
        %1284 = vmatprep.subr.mxu0 0.0
        %1285 = vmatpush1.xpose.msra.mxu0 0.0
        %1286 = vmatprep.subr.mxu0 0.0
        %1287 = vmatpush1.xpose.msra.mxu0 0.0
        %1288 = vmatprep.subr.mxu0 0.0
        %1289 = vmatpush1.xpose.msra.mxu0 0.0
        %1290 = vmatprep.subr.mxu0 0.0
        %1291 = vmatpush1.xpose.msra.mxu0 0.0
        %1292 = vmatprep.subr.mxu0 0.0
        %1293 = vmatpush1.xpose.msra.mxu0 0.0
        %1294 = vmatprep.subr.mxu0 0.0
        %1295 = vmatpush1.xpose.msra.mxu0 0.0
        %1296 = vmatprep.subr.mxu0 0.0
        %1297 = vmatpush1.xpose.msra.mxu0 0.0
        %1298 = vmatprep.subr.mxu0 0.0
        %1299 = vmatpush1.xpose.msra.mxu0 0.0
        %1300 = vmatprep.subr.mxu0 0.0
        %1301 = vmatpush1.xpose.msra.mxu0 0.0
        %1302 = vmatprep.subr.mxu0 0.0
        %1303 = vmatpush1.xpose.msra.mxu0 0.0
        %1304 = vmatprep.subr.mxu0 0.0
        %1305 = vmatpush1.xpose.msra.mxu0 0.0
        %1306 = vmatprep.subr.mxu0 0.0
        %1307 = vmatpush1.xpose.msra.mxu0 0.0
        %1308 = vmatprep.subr.mxu0 0.0
        %1309 = vmatpush1.xpose.msra.mxu0 0.0
        %1310 = vmatprep.subr.mxu0 0.0
        %1311 = vmatpush1.xpose.msra.mxu0 0.0
        %1312 = vmatprep.subr.mxu0 0.0
        %1313 = vmatpush1.xpose.msra.mxu0 0.0
        %1314 = vmatprep.subr.mxu0 0.0
        %1315 = vmatpush1.xpose.msra.mxu0 0.0
        %1316 = vmatprep.subr.mxu0 0.0
        %1317 = vmatpush1.xpose.msra.mxu0 0.0
        %1318 = vmatprep.subr.mxu0 0.0
        %1319 = vmatpush1.xpose.msra.mxu0 0.0
        %1320 = vmatprep.subr.mxu0 0.0
        %1321 = vmatpush1.xpose.msra.mxu0 0.0
        %1322 = vmatprep.subr.mxu0 0.0
        %1323 = vmatpush1.xpose.msra.mxu0 0.0
        %1324 = vmatprep.subr.mxu0 0.0
        %1325 = vmatpush1.xpose.msra.mxu0 0.0
        %1326 = vmatprep.subr.mxu0 0.0
        %1327 = vmatpush1.xpose.msra.mxu0 0.0
        %1328 = vmatprep.subr.mxu0 0.0
        %1329 = vmatpush1.xpose.msra.mxu0 0.0
        %1330 = vmatprep.subr.mxu0 0.0
        %1331 = vmatpush1.xpose.msra.mxu0 0.0
        %1332 = vmatprep.subr.mxu0 0.0
        %1333 = vmatpush1.xpose.msra.mxu0 0.0
        %1334 = vmatprep.mubr.f32.mxu0 0.0
        %1335 = vmatmul.mubr.f32.gmra.mrb[0].mxu0 %v1262
        %v1336 = vpop.f32.mrb[0].mxu0
        %v1337 = vadd.f32 0.0, %v1336
        %v1338 = vpop.f32.mrb[0].mxu0
        %1339 = vmatprep.mubr.f32.mxu0 0.0
        %1340 = vmatmul.mubr.f32.gmra.mrb[0].mxu0 %v1264
        %v1341 = vpop.f32.mrb[0].mxu0
        %v1342 = vadd.f32 0.0, %v1341
        %v1343 = vpop.f32.mrb[0].mxu0
        %1344 = vdwg.mxu0
        %v1345 = vmul.f32 %v1337, 0.17677669
        %v1346 = vmul.f32 %v1342, 0.17677669
        %v1347 = vsel %vm946, %v1345, -inf
        %1348 = vmax.xlane.f32.xlu0 %v1347
        %v1349 = vpop.xlane.xlu0 %1348
        %v1350 = vsel %vm946, %v1346, -inf
        %1351 = vmax.xlane.f32.xlu0 %v1350
        %v1352 = vpop.xlane.xlu0 %1351
        %v1353 = vsub.f32 %v1345, %v1349
        %v1354 = vsub.f32 %v1346, %v1352
        %v1355 = vmul.f32 %v1353, 1.442695
        %v1356 = vpow.pop %v1355
        %v1357 = vmul.f32 %v1354, 1.442695
        %v1358 = vpow.pop %v1357
        %v1359 = vsel %vm946, %v1356, 0.0
        %1360 = vadd.xlane.f32.xlu0 %v1359
        %v1361 = vpop.xlane.xlu0 %1360
        %v1362 = vsel %vm946, %v1358, 0.0
        %1363 = vadd.xlane.f32.xlu0 %v1362
        %v1364 = vpop.xlane.xlu0 %1363
        %v1365 = vrcp.pop %v1361
        %v1366 = vmul.f32 %v1356, %v1365
        %v1367 = vrcp.pop %v1364
        %v1368 = vmul.f32 %v1358, %v1367
        %1369 = vrot.lane.b32.xlu0 %v848, 64
        %v1370 = vpop.permute.xlu0 %1369
        %1371 = vrot.lane.b32.xlu0 %v853, 64
        %v1372 = vpop.permute.xlu0 %1371
        %v1376 = vsel %vm946, %v1366, 0
        %v1379 = vsel %vm946, %v1368, 0
        %1381 = vmatprep.subr.mxu0 0.0
        %1382 = vmatpush1.msra.mxu0 %v1370
        %1383 = vmatprep.subr.mxu0 0.0
        %1384 = vmatpush1.msra.mxu0 %v1372
        %1385 = vmatprep.subr.mxu0 0.0
        %1386 = vmatpush1.msra.mxu0 0.0
        %1387 = vmatprep.subr.mxu0 0.0
        %1388 = vmatpush1.msra.mxu0 0.0
        %1389 = vmatprep.subr.mxu0 0.0
        %1390 = vmatpush1.msra.mxu0 0.0
        %1391 = vmatprep.subr.mxu0 0.0
        %1392 = vmatpush1.msra.mxu0 0.0
        %1393 = vmatprep.subr.mxu0 0.0
        %1394 = vmatpush1.msra.mxu0 0.0
        %1395 = vmatprep.subr.mxu0 0.0
        %1396 = vmatpush1.msra.mxu0 0.0
        %1397 = vmatprep.subr.mxu0 0.0
        %1398 = vmatpush1.msra.mxu0 0.0
        %1399 = vmatprep.subr.mxu0 0.0
        %1400 = vmatpush1.msra.mxu0 0.0
        %1401 = vmatprep.subr.mxu0 0.0
        %1402 = vmatpush1.msra.mxu0 0.0
        %1403 = vmatprep.subr.mxu0 0.0
        %1404 = vmatpush1.msra.mxu0 0.0
        %1405 = vmatprep.subr.mxu0 0.0
        %1406 = vmatpush1.msra.mxu0 0.0
        %1407 = vmatprep.subr.mxu0 0.0
        %1408 = vmatpush1.msra.mxu0 0.0
        %1409 = vmatprep.subr.mxu0 0.0
        %1410 = vmatpush1.msra.mxu0 0.0
        %1411 = vmatprep.subr.mxu0 0.0
        %1412 = vmatpush1.msra.mxu0 0.0
        %1413 = vmatprep.subr.mxu0 0.0
        %1414 = vmatpush1.msra.mxu0 0.0
        %1415 = vmatprep.subr.mxu0 0.0
        %1416 = vmatpush1.msra.mxu0 0.0
        %1417 = vmatprep.subr.mxu0 0.0
        %1418 = vmatpush1.msra.mxu0 0.0
        %1419 = vmatprep.subr.mxu0 0.0
        %1420 = vmatpush1.msra.mxu0 0.0
        %1421 = vmatprep.subr.mxu0 0.0
        %1422 = vmatpush1.msra.mxu0 0.0
        %1423 = vmatprep.subr.mxu0 0.0
        %1424 = vmatpush1.msra.mxu0 0.0
        %1425 = vmatprep.subr.mxu0 0.0
        %1426 = vmatpush1.msra.mxu0 0.0
        %1427 = vmatprep.subr.mxu0 0.0
        %1428 = vmatpush1.msra.mxu0 0.0
        %1429 = vmatprep.subr.mxu0 0.0
        %1430 = vmatpush1.msra.mxu0 0.0
        %1431 = vmatprep.subr.mxu0 0.0
        %1432 = vmatpush1.msra.mxu0 0.0
        %1433 = vmatprep.subr.mxu0 0.0
        %1434 = vmatpush1.msra.mxu0 0.0
        %1435 = vmatprep.subr.mxu0 0.0
        %1436 = vmatpush1.msra.mxu0 0.0
        %1437 = vmatprep.subr.mxu0 0.0
        %1438 = vmatpush1.msra.mxu0 0.0
        %1439 = vmatprep.subr.mxu0 0.0
        %1440 = vmatpush1.msra.mxu0 0.0
        %1441 = vmatprep.subr.mxu0 0.0
        %1442 = vmatpush1.msra.mxu0 0.0
        %1443 = vmatprep.subr.mxu0 0.0
        %1444 = vmatpush1.msra.mxu0 0.0
        %1445 = vmatprep.mubr.f32.mxu0 0.0
        %1446 = vmatmul.mubr.f32.gmra.mrb[0].mxu0 %v1376
        %v1447 = vpop.f32.mrb[0].mxu0
        %v1448 = vadd.f32 0.0, %v1447
        %v1449 = vpop.f32.mrb[0].mxu0
        %1450 = vmatprep.mubr.f32.mxu0 0.0
        %1451 = vmatmul.mubr.f32.gmra.mrb[0].mxu0 %v1379
        %v1452 = vpop.f32.mrb[0].mxu0
        %v1453 = vadd.f32 0.0, %v1452
        %v1454 = vpop.f32.mrb[0].mxu0
        %1455 = vdwg.mxu0
        %1456 = vrot.lane.b32.xlu0 %v684, 32
        %v1457 = vpop.permute.xlu0 %1456
        %1458 = vrot.lane.b32.xlu0 %v689, 32
        %v1459 = vpop.permute.xlu0 %1458
        %1460 = vrot.lane.b32.xlu0 %v766, 32
        %v1461 = vpop.permute.xlu0 %1460
        %1462 = vrot.lane.b32.xlu0 %v771, 32
        %v1463 = vpop.permute.xlu0 %1462
        %v1464 = vsel %vm856, %v1457, 0
        %v1466 = vsel %vm856, %v1459, 0
        %v1468 = vsel %vm856, %v1461, 0
        %v1470 = vsel %vm856, %v1463, 0
        %1472 = vmatprep.subr.mxu0 0.0
        %1473 = vmatpush1.xpose.msra.mxu0 %v1468
        %1474 = vmatprep.subr.mxu0 0.0
        %1475 = vmatpush1.xpose.msra.mxu0 %v1470
        %1476 = vmatprep.subr.mxu0 0.0
        %1477 = vmatpush1.xpose.msra.mxu0 0.0
        %1478 = vmatprep.subr.mxu0 0.0
        %1479 = vmatpush1.xpose.msra.mxu0 0.0
        %1480 = vmatprep.subr.mxu0 0.0
        %1481 = vmatpush1.xpose.msra.mxu0 0.0
        %1482 = vmatprep.subr.mxu0 0.0
        %1483 = vmatpush1.xpose.msra.mxu0 0.0
        %1484 = vmatprep.subr.mxu0 0.0
        %1485 = vmatpush1.xpose.msra.mxu0 0.0
        %1486 = vmatprep.subr.mxu0 0.0
        %1487 = vmatpush1.xpose.msra.mxu0 0.0
        %1488 = vmatprep.subr.mxu0 0.0
        %1489 = vmatpush1.xpose.msra.mxu0 0.0
        %1490 = vmatprep.subr.mxu0 0.0
        %1491 = vmatpush1.xpose.msra.mxu0 0.0
        %1492 = vmatprep.subr.mxu0 0.0
        %1493 = vmatpush1.xpose.msra.mxu0 0.0
        %1494 = vmatprep.subr.mxu0 0.0
        %1495 = vmatpush1.xpose.msra.mxu0 0.0
        %1496 = vmatprep.subr.mxu0 0.0
        %1497 = vmatpush1.xpose.msra.mxu0 0.0
        %1498 = vmatprep.subr.mxu0 0.0
        %1499 = vmatpush1.xpose.msra.mxu0 0.0
        %1500 = vmatprep.subr.mxu0 0.0
        %1501 = vmatpush1.xpose.msra.mxu0 0.0
        %1502 = vmatprep.subr.mxu0 0.0
        %1503 = vmatpush1.xpose.msra.mxu0 0.0
        %1504 = vmatprep.subr.mxu0 0.0
        %1505 = vmatpush1.xpose.msra.mxu0 0.0
        %1506 = vmatprep.subr.mxu0 0.0
        %1507 = vmatpush1.xpose.msra.mxu0 0.0
        %1508 = vmatprep.subr.mxu0 0.0
        %1509 = vmatpush1.xpose.msra.mxu0 0.0
        %1510 = vmatprep.subr.mxu0 0.0
        %1511 = vmatpush1.xpose.msra.mxu0 0.0
        %1512 = vmatprep.subr.mxu0 0.0
        %1513 = vmatpush1.xpose.msra.mxu0 0.0
        %1514 = vmatprep.subr.mxu0 0.0
        %1515 = vmatpush1.xpose.msra.mxu0 0.0
        %1516 = vmatprep.subr.mxu0 0.0
        %1517 = vmatpush1.xpose.msra.mxu0 0.0
        %1518 = vmatprep.subr.mxu0 0.0
        %1519 = vmatpush1.xpose.msra.mxu0 0.0
        %1520 = vmatprep.subr.mxu0 0.0
        %1521 = vmatpush1.xpose.msra.mxu0 0.0
        %1522 = vmatprep.subr.mxu0 0.0
        %1523 = vmatpush1.xpose.msra.mxu0 0.0
        %1524 = vmatprep.subr.mxu0 0.0
        %1525 = vmatpush1.xpose.msra.mxu0 0.0
        %1526 = vmatprep.subr.mxu0 0.0
        %1527 = vmatpush1.xpose.msra.mxu0 0.0
        %1528 = vmatprep.subr.mxu0 0.0
        %1529 = vmatpush1.xpose.msra.mxu0 0.0
        %1530 = vmatprep.subr.mxu0 0.0
        %1531 = vmatpush1.xpose.msra.mxu0 0.0
        %1532 = vmatprep.subr.mxu0 0.0
        %1533 = vmatpush1.xpose.msra.mxu0 0.0
        %1534 = vmatprep.subr.mxu0 0.0
        %1535 = vmatpush1.xpose.msra.mxu0 0.0
        %1536 = vmatprep.mubr.f32.mxu0 0.0
        %1537 = vmatmul.mubr.f32.gmra.mrb[0].mxu0 %v1464
        %v1538 = vpop.f32.mrb[0].mxu0
        %v1539 = vadd.f32 0.0, %v1538
        %v1540 = vpop.f32.mrb[0].mxu0
        %1541 = vmatprep.mubr.f32.mxu0 0.0
        %1542 = vmatmul.mubr.f32.gmra.mrb[0].mxu0 %v1466
        %v1543 = vpop.f32.mrb[0].mxu0
        %v1544 = vadd.f32 0.0, %v1543
        %v1545 = vpop.f32.mrb[0].mxu0
        %1546 = vdwg.mxu0
        %v1547 = vmul.f32 %v1539, 0.17677669
        %v1548 = vmul.f32 %v1544, 0.17677669
        %v1549 = vsel %vm946, %v1547, -inf
        %1550 = vmax.xlane.f32.xlu0 %v1549
        %v1551 = vpop.xlane.xlu0 %1550
        %v1552 = vsel %vm946, %v1548, -inf
        %1553 = vmax.xlane.f32.xlu0 %v1552
        %v1554 = vpop.xlane.xlu0 %1553
        %v1555 = vsub.f32 %v1547, %v1551
        %v1556 = vsub.f32 %v1548, %v1554
        %v1557 = vmul.f32 %v1555, 1.442695
        %v1558 = vpow.pop %v1557
        %v1559 = vmul.f32 %v1556, 1.442695
        %v1560 = vpow.pop %v1559
        %v1561 = vsel %vm946, %v1558, 0.0
        %1562 = vadd.xlane.f32.xlu0 %v1561
        %v1563 = vpop.xlane.xlu0 %1562
        %v1564 = vsel %vm946, %v1560, 0.0
        %1565 = vadd.xlane.f32.xlu0 %v1564
        %v1566 = vpop.xlane.xlu0 %1565
        %v1567 = vrcp.pop %v1563
        %v1568 = vmul.f32 %v1558, %v1567
        %v1569 = vrcp.pop %v1566
        %v1570 = vmul.f32 %v1560, %v1569
        %1571 = vrot.lane.b32.xlu0 %v848, 32
        %v1572 = vpop.permute.xlu0 %1571
        %1573 = vrot.lane.b32.xlu0 %v853, 32
        %v1574 = vpop.permute.xlu0 %1573
        %v1578 = vsel %vm946, %v1568, 0
        %v1581 = vsel %vm946, %v1570, 0
        %1583 = vmatprep.subr.mxu0 0.0
        %1584 = vmatpush1.msra.mxu0 %v1572
        %1585 = vmatprep.subr.mxu0 0.0
        %1586 = vmatpush1.msra.mxu0 %v1574
        %1587 = vmatprep.subr.mxu0 0.0
        %1588 = vmatpush1.msra.mxu0 0.0
        %1589 = vmatprep.subr.mxu0 0.0
        %1590 = vmatpush1.msra.mxu0 0.0
        %1591 = vmatprep.subr.mxu0 0.0
        %1592 = vmatpush1.msra.mxu0 0.0
        %1593 = vmatprep.subr.mxu0 0.0
        %1594 = vmatpush1.msra.mxu0 0.0
        %1595 = vmatprep.subr.mxu0 0.0
        %1596 = vmatpush1.msra.mxu0 0.0
        %1597 = vmatprep.subr.mxu0 0.0
        %1598 = vmatpush1.msra.mxu0 0.0
        %1599 = vmatprep.subr.mxu0 0.0
        %1600 = vmatpush1.msra.mxu0 0.0
        %1601 = vmatprep.subr.mxu0 0.0
        %1602 = vmatpush1.msra.mxu0 0.0
        %1603 = vmatprep.subr.mxu0 0.0
        %1604 = vmatpush1.msra.mxu0 0.0
        %1605 = vmatprep.subr.mxu0 0.0
        %1606 = vmatpush1.msra.mxu0 0.0
        %1607 = vmatprep.subr.mxu0 0.0
        %1608 = vmatpush1.msra.mxu0 0.0
        %1609 = vmatprep.subr.mxu0 0.0
        %1610 = vmatpush1.msra.mxu0 0.0
        %1611 = vmatprep.subr.mxu0 0.0
        %1612 = vmatpush1.msra.mxu0 0.0
        %1613 = vmatprep.subr.mxu0 0.0
        %1614 = vmatpush1.msra.mxu0 0.0
        %1615 = vmatprep.subr.mxu0 0.0
        %1616 = vmatpush1.msra.mxu0 0.0
        %1617 = vmatprep.subr.mxu0 0.0
        %1618 = vmatpush1.msra.mxu0 0.0
        %1619 = vmatprep.subr.mxu0 0.0
        %1620 = vmatpush1.msra.mxu0 0.0
        %1621 = vmatprep.subr.mxu0 0.0
        %1622 = vmatpush1.msra.mxu0 0.0
        %1623 = vmatprep.subr.mxu0 0.0
        %1624 = vmatpush1.msra.mxu0 0.0
        %1625 = vmatprep.subr.mxu0 0.0
        %1626 = vmatpush1.msra.mxu0 0.0
        %1627 = vmatprep.subr.mxu0 0.0
        %1628 = vmatpush1.msra.mxu0 0.0
        %1629 = vmatprep.subr.mxu0 0.0
        %1630 = vmatpush1.msra.mxu0 0.0
        %1631 = vmatprep.subr.mxu0 0.0
        %1632 = vmatpush1.msra.mxu0 0.0
        %1633 = vmatprep.subr.mxu0 0.0
        %1634 = vmatpush1.msra.mxu0 0.0
        %1635 = vmatprep.subr.mxu0 0.0
        %1636 = vmatpush1.msra.mxu0 0.0
        %1637 = vmatprep.subr.mxu0 0.0
        %1638 = vmatpush1.msra.mxu0 0.0
        %1639 = vmatprep.subr.mxu0 0.0
        %1640 = vmatpush1.msra.mxu0 0.0
        %1641 = vmatprep.subr.mxu0 0.0
        %1642 = vmatpush1.msra.mxu0 0.0
        %1643 = vmatprep.subr.mxu0 0.0
        %1644 = vmatpush1.msra.mxu0 0.0
        %1645 = vmatprep.subr.mxu0 0.0
        %1646 = vmatpush1.msra.mxu0 0.0
        %1647 = vmatprep.mubr.f32.mxu0 0.0
        %1648 = vmatmul.mubr.f32.gmra.mrb[0].mxu0 %v1578
        %v1649 = vpop.f32.mrb[0].mxu0
        %v1650 = vadd.f32 0.0, %v1649
        %v1651 = vpop.f32.mrb[0].mxu0
        %1652 = vmatprep.mubr.f32.mxu0 0.0
        %1653 = vmatmul.mubr.f32.gmra.mrb[0].mxu0 %v1581
        %v1654 = vpop.f32.mrb[0].mxu0
        %v1655 = vadd.f32 0.0, %v1654
        %v1656 = vpop.f32.mrb[0].mxu0
        %1657 = vdwg.mxu0
        %1660 = vrot.lane.b32.xlu0 %v1246, 32
        %v1661 = vpop.permute.xlu0 %1660
        %1662 = vrot.lane.b32.xlu0 %v1251, 32
        %v1663 = vpop.permute.xlu0 %1662
        %1668 = vrot.lane.b32.xlu0 %v1448, 64
        %v1669 = vpop.permute.xlu0 %1668
        %1670 = vrot.lane.b32.xlu0 %v1453, 64
        %v1671 = vpop.permute.xlu0 %1670
        %1676 = vrot.lane.b32.xlu0 %v1650, 96
        %v1677 = vpop.permute.xlu0 %1676
        %1678 = vrot.lane.b32.xlu0 %v1655, 96
        %v1679 = vpop.permute.xlu0 %1678
        %v1682 = vsel %vm856, %v1042, %v1661
        %v1683 = vsel %vm856, %v1047, %v1663
        %vm1684 = vcmask 523264
        %v1685 = vsel %vm1684, %v1682, %v1669
        %v1686 = vsel %vm1684, %v1683, %v1671
        %vm1687 = vcmask 785408
        %v1688 = vsel %vm1687, %v1685, %v1677
        %v1689 = vsel %vm1687, %v1686, %v1679
        %v1690 = vld [vmem:[%s10] sm:$0x1]
        %v1692 = vlaneseq
        %v1693 = vshrl.u32 %v1692, 7
        %v1694 = vsub.s32 0, %v1693
        %v1695 = vrot.slane %v1690, %v1694
        %1697 = vmatprep.subr.mxu0 0.0
        %1698 = vmatpush1.msra.mxu0 %v594
        %1699 = vmatprep.subr.mxu0 0.0
        %1700 = vmatpush1.msra.mxu0 %v595
        %1701 = vmatprep.subr.mxu0 0.0
        %1702 = vmatpush1.msra.mxu0 %v596
        %1703 = vmatprep.subr.mxu0 0.0
        %1704 = vmatpush1.msra.mxu0 %v597
        %1705 = vmatprep.subr.mxu0 0.0
        %1706 = vmatpush1.msra.mxu0 %v598
        %1707 = vmatprep.subr.mxu0 0.0
        %1708 = vmatpush1.msra.mxu0 %v599
        %1709 = vmatprep.subr.mxu0 0.0
        %1710 = vmatpush1.msra.mxu0 %v600
        %1711 = vmatprep.subr.mxu0 0.0
        %1712 = vmatpush1.msra.mxu0 %v601
        %1713 = vmatprep.subr.mxu0 0.0
        %1714 = vmatpush1.msra.mxu0 %v602
        %1715 = vmatprep.subr.mxu0 0.0
        %1716 = vmatpush1.msra.mxu0 %v603
        %1717 = vmatprep.subr.mxu0 0.0
        %1718 = vmatpush1.msra.mxu0 %v604
        %1719 = vmatprep.subr.mxu0 0.0
        %1720 = vmatpush1.msra.mxu0 %v605
        %1721 = vmatprep.subr.mxu0 0.0
        %1722 = vmatpush1.msra.mxu0 %v606
        %1723 = vmatprep.subr.mxu0 0.0
        %1724 = vmatpush1.msra.mxu0 %v607
        %1725 = vmatprep.subr.mxu0 0.0
        %1726 = vmatpush1.msra.mxu0 %v608
        %1727 = vmatprep.subr.mxu0 0.0
        %1728 = vmatpush1.msra.mxu0 %v609
        %1729 = vmatprep.subr.mxu0 0.0
        %1730 = vmatpush1.msra.mxu0 0.0
        %1731 = vmatprep.subr.mxu0 0.0
        %1732 = vmatpush1.msra.mxu0 0.0
        %1733 = vmatprep.subr.mxu0 0.0
        %1734 = vmatpush1.msra.mxu0 0.0
        %1735 = vmatprep.subr.mxu0 0.0
        %1736 = vmatpush1.msra.mxu0 0.0
        %1737 = vmatprep.subr.mxu0 0.0
        %1738 = vmatpush1.msra.mxu0 0.0
        %1739 = vmatprep.subr.mxu0 0.0
        %1740 = vmatpush1.msra.mxu0 0.0
        %1741 = vmatprep.subr.mxu0 0.0
        %1742 = vmatpush1.msra.mxu0 0.0
        %1743 = vmatprep.subr.mxu0 0.0
        %1744 = vmatpush1.msra.mxu0 0.0
        %1745 = vmatprep.subr.mxu0 0.0
        %1746 = vmatpush1.msra.mxu0 0.0
        %1747 = vmatprep.subr.mxu0 0.0
        %1748 = vmatpush1.msra.mxu0 0.0
        %1749 = vmatprep.subr.mxu0 0.0
        %1750 = vmatpush1.msra.mxu0 0.0
        %1751 = vmatprep.subr.mxu0 0.0
        %1752 = vmatpush1.msra.mxu0 0.0
        %1753 = vmatprep.subr.mxu0 0.0
        %1754 = vmatpush1.msra.mxu0 0.0
        %1755 = vmatprep.subr.mxu0 0.0
        %1756 = vmatpush1.msra.mxu0 0.0
        %1757 = vmatprep.subr.mxu0 0.0
        %1758 = vmatpush1.msra.mxu0 0.0
        %1759 = vmatprep.subr.mxu0 0.0
        %1760 = vmatpush1.msra.mxu0 0.0
        %1761 = vmatprep.mubr.f32.mxu0 0.0
        %1762 = vmatmul.mubr.f32.gmra.mrb[0].mxu0 %v1688
        %v1763 = vpop.f32.mrb[0].mxu0
        %v1764 = vadd.f32 %v1695, %v1763
        %v1765 = vpop.f32.mrb[0].mxu0
        %1766 = vmatprep.mubr.f32.mxu0 0.0
        %1767 = vmatmul.mubr.f32.gmra.mrb[0].mxu0 %v1689
        %v1768 = vpop.f32.mrb[0].mxu0
        %v1769 = vadd.f32 %v1695, %v1768
        %v1770 = vpop.f32.mrb[0].mxu0
        %1771 = vdwg.mxu0
        %1772 = vst [vmem:[%s539] sm:$0xff] %v1764
        %1773 = vst [vmem:[%s539 + $0x8] sm:$0xff] %v1769
        %s1774 = sand.u32 %s287, 1
        %s1775 = scalar_lea.sflag [#allocation4], %s1774
        %s1776 = sand.u32 %s287, 1
        %s1777 = smul.addr %s1776, 16
        %s1778 = scalar_lea.vmem [#allocation14], %s1777
        // Predicated region
        $region93: #{tpu_custom_call.1} parent=63 // pred_check
          %p1779 = pneg %p297
        $region94: #{tpu_custom_call.1} parent=63 // pred_check_branch
          %1781 = sbr.rel (%p1779) target = $region96
        $region95: #{tpu_custom_call.1} parent=63 // pred_region
          %s1783 = ssub.s32 256, 256
          %1784 = vsyncadd %s1775, %s1783
          %s1785 = smul.addr %s33, 2
          %s1786 = smul.addr %s1785, 128
          %s1787 = scalar_lea.hbm %s11, %s1786
          %s1788 = sshll.u32 %s1778, 4
          %s1789 = int_to_ptr.vmem [resolvable:$true] %s1788
          %1794 = dma.vmem_to_hbm [thread:$0]  %s1789, 256, %s1787, %s1775, 128, 128, 8
        $region96: #{tpu_custom_call.1} parent=63 // pred_fallthru
          _
      $region64: #{tpu_custom_call.1} parent=5 // pred_fallthru
        _
      %p1795 = scmp.le.s32.totalorder 2, %s28
      // Predicated region
      $region97: #{tpu_custom_call.1} parent=5 // pred_check
        %p1796 = pneg %p1795
      $region98: #{tpu_custom_call.1} parent=5 // pred_check_branch
        %1798 = sbr.rel (%p1796) target = $region100
      $region99: #{tpu_custom_call.1} parent=5 // pred_region
        %s1799 = ssub.s32 %s28, 2
        // Predicated region
        $region101: #{tpu_custom_call.1} parent=99 // pred_check
          %p1800 = pneg %p303
        $region102: #{tpu_custom_call.1} parent=99 // pred_check_branch
          %1802 = sbr.rel (%p1800) target = $region104
        $region103: #{tpu_custom_call.1} parent=99 // pred_region
          %s1803 = sand.u32 %s288, 1
          %s1804 = scalar_lea.sflag [#allocation4], %s1803
          %s1805 = sand.u32 %s288, 1
          %s1806 = smul.addr %s1805, 16
          %s1807 = scalar_lea.vmem [#allocation14], %s1806
          %1808 = dma.done %s1804, 256
        $region104: #{tpu_custom_call.1} parent=99 // pred_fallthru
          _
      $region100: #{tpu_custom_call.1} parent=5 // pred_fallthru
        _
    $region6: #{tpu_custom_call.1} parent=1 // loop_footer
      %s32 = sadd.s32 1, %s28
    $region7: #{tpu_custom_call.1} parent=1 // loop_footer_branch
      %27 = sbr.rel target = $region3
    $region8: #{tpu_custom_call.1} parent=1 // loop_exit
      _
    %1809 = vsyncpa [#allocation3], 1
    %s1810 = scalar_lea.sflag [#allocation3], 1
    %1811 = vsyncpa %s1810, 1
    %1812 = vsyncpa [#allocation6], 1
    %s1813 = scalar_lea.sflag [#allocation6], 1
    %1814 = vsyncpa %s1813, 1
    %1815 = vsyncpa [#allocation9], 1
    %1816 = vsyncpa [#allocation12], 1
    %1817 = vsyncpa [#allocation4], 1
    %s1818 = scalar_lea.sflag [#allocation4], 1
    %1819 = vsyncpa %s1818, 1

</llo_original>
